<compile_context>
chip_gen: v5e
topology: v5e:2x2
jax: 0.10.0
libtpu: 0.0.40
codegen_flags: <defaults>
</compile_context>

<pallas_src>
import functools

import jax
import jax.numpy as jnp
from jax import lax
from jax.experimental import pallas as pl
from jax.experimental.pallas import tpu as pltpu


# --------------------------------------------------------------------------
# Host-side builders for the small structural constants (built once, bf16/f32).
# Lane index convention: global column = b * L + l  (batch-major in lanes).
# --------------------------------------------------------------------------
def _edge_masks(l, bblk, dtype):
    """Masks that zero the per-batch boundary column after a +/-1 roll."""
    c = jnp.arange(bblk * l)
    mask_prev = (c % l != 0).astype(dtype)[None, :]        # zero at l == 0
    mask_next = (c % l != l - 1).astype(dtype)[None, :]     # zero at l == L-1
    return mask_prev, mask_next


def _pool_select_mat(l_in, bblk, dtype):
    """P[bblk*l_in, bblk*(l_in//2)] with P[b*l_in + 2j, b*l_out + j] = 1."""
    l_out = l_in // 2
    j = jnp.arange(bblk * l_out)
    src = (j // l_out) * l_in + 2 * (j % l_out)
    i = jnp.arange(bblk * l_in)
    return (i[:, None] == src[None, :]).astype(dtype)


def _upsample_mat(l_in, l_out, bblk, parity, dtype):
    """U[bblk*l_in, bblk*l_out] with U[b*l_in + l, b*l_out + 2l + parity] = 1.

    Columns beyond the decoded length (when l_out > 2*l_in) get no entry, which
    implements the PyTorch-style zero padding of the decoder tail for free.
    """
    r = jnp.arange(bblk * l_in)
    tgt = (r // l_in) * l_out + 2 * (r % l_in) + parity
    cols = jnp.arange(bblk * l_out)
    return (tgt[:, None] == cols[None, :]).astype(dtype)


def _pad8(n):
    return -(-n // 8) * 8


def _pick_bblk(B, L0):
    """Batch block: prefer 128-aligned roll widths, then a grid of >= 2 steps."""
    L1 = L0 // 2
    best_d, best_key = B, None
    for d in range(1, B + 1):
        if B % d:
            continue
        g = B // d
        if g > 1 and (d * L0) % 128 != 0:   # BlockSpec lane constraint
            continue
        aligned = (d * L0) % 128 == 0 and (d * L1) % 128 == 0
        key = (aligned, g >= 2, -abs(d - 8))
        if best_key is None or key > best_key:
            best_d, best_key = d, key
    return best_d


# --------------------------------------------------------------------------
# Fused autoencoder kernel: one grid step == one block of batch elements,
# activations kept channel-major [C, Bblk*L] (lanes = batch x length).
# --------------------------------------------------------------------------
def _cnn_ae_kernel(x_ref, w1_ref, b1_ref, w2_ref, b2_ref,
                   d1_ref, bd1_ref, d2_ref, bd2_ref,
                   mp0_ref, mn0_ref, mp1_ref, mn1_ref,
                   p0_ref, p1_ref, u1e_ref, u1o_ref, u2e_ref, u2o_ref,
                   o_ref, *, c_in, h0, h1):
    f32 = jnp.float32
    bf16 = jnp.bfloat16

    def shift(x, direction):
        # direction=+1: out[:, j] = x[:, j-1]; direction=-1: out[:, j] = x[:, j+1]
        n = x.shape[-1]
        if n % 128 == 0:
            # XLU lane rotate (wrap-around is zeroed by the boundary masks /
            # never selected by the pool matrix).
            return pltpu.roll(x, shift=(1 if direction > 0 else n - 1), axis=1)
        # Fallback for non-128-aligned widths: tiny structural shift matmul.
        i = lax.broadcasted_iota(jnp.int32, (n, n), 0)
        j = lax.broadcasted_iota(jnp.int32, (n, n), 1)
        s = (j == i + direction).astype(f32)
        return jnp.dot(x, s, preferred_element_type=f32)

    def conv3(a, w_ref_, b_ref_, mp_ref_, mn_ref_, co):
        # a: [ci, N] f32.  w_ref_: [3*co, ci] bf16, tap-major row blocks.
        # One MXU matmul for all three taps, then roll the per-tap outputs.
        z = jnp.dot(w_ref_[...], a.astype(bf16), preferred_element_type=f32)
        z0 = z[0:co]            # tap 0 (needs x[l-1])
        z1 = z[co:2 * co]       # tap 1 (x[l])
        z2 = z[2 * co:3 * co]   # tap 2 (x[l+1])
        y = (shift(z0, +1) * mp_ref_[...]
             + z1
             + shift(z2, -1) * mn_ref_[...])
        return y + b_ref_[...]

    def maxpool2(a, p_ref_):
        # MaxPool1d(kernel=2, stride=2) along lanes: max with the next column,
        # then select even (within-batch) columns via a 0/1 matrix.
        m = jnp.maximum(a, shift(a, -1))
        return jnp.dot(m.astype(bf16), p_ref_[...], preferred_element_type=f32)

    def deconv2x(a, d_ref_, b_ref_, ue_ref_, uo_ref_, co):
        # ConvTranspose1d(kernel=2, stride=2).  d_ref_: [2*pad8(co), ci] bf16
        # with tap0 in rows [0:co] and tap1 in rows [pad8(co):pad8(co)+co].
        pad = d_ref_.shape[0] // 2
        e = jnp.dot(d_ref_[...], a.astype(bf16), preferred_element_type=f32)
        bias = b_ref_[...]
        e0 = (e[0:co] + bias).astype(bf16)           # -> out[:, 2l]
        e1 = (e[pad:pad + co] + bias).astype(bf16)   # -> out[:, 2l+1]
        # Bias is added *before* the interleave so padded tail columns stay 0.
        return (jnp.dot(e0, ue_ref_[...], preferred_element_type=f32)
                + jnp.dot(e1, uo_ref_[...], preferred_element_type=f32))

    x = x_ref[...].astype(f32)                                   # [Cin, N0]
    h = jnp.maximum(conv3(x, w1_ref, b1_ref, mp0_ref, mn0_ref, h0), 0.0)
    h = maxpool2(h, p0_ref)                                      # [h0, N1]
    h = jnp.maximum(conv3(h, w2_ref, b2_ref, mp1_ref, mn1_ref, h1), 0.0)
    h = maxpool2(h, p1_ref)                                      # [h1, N2]
    h = jnp.maximum(deconv2x(h, d1_ref, bd1_ref, u1e_ref, u1o_ref, h0), 0.0)
    dec = deconv2x(h, d2_ref, bd2_ref, u2e_ref, u2o_ref, c_in)   # [Cin, N0]
    o_ref[...] = dec.astype(o_ref.dtype)


# --------------------------------------------------------------------------
# Wrapper: PyTorch parameter conventions -> kernel-friendly packed layout.
# --------------------------------------------------------------------------
def cnn_autoencoder_forward(x, params):
    """Forward pass of CnnAutoencoder.

    Args:
      x: [batch, input_channels, sequence_length]  (PyTorch NCL layout)
      params: PyTorch-convention weights:
        conv1_w [h0, Cin, 3], conv1_b [h0],
        conv2_w [h1, h0, 3],  conv2_b [h1],
        deconv1_w [h1, h0, 2], deconv1_b [h0],
        deconv2_w [h0, Cin, 2], deconv2_b [Cin]
    Returns:
      [batch, input_channels, sequence_length]
    """
    B, C_in, L0 = x.shape
    assert L0 >= 4, "sequence_length must be >= 4"
    w1, b1 = params["conv1_w"], params["conv1_b"]
    w2, b2 = params["conv2_w"], params["conv2_b"]
    d1, bd1 = params["deconv1_w"], params["deconv1_b"]
    d2, bd2 = params["deconv2_w"], params["deconv2_b"]
    h0, h1 = w1.shape[0], w2.shape[0]

    L1 = L0 // 2
    L2 = L1 // 2
    L3 = 2 * L2

    f32, bf16 = jnp.float32, jnp.bfloat16

    bblk = _pick_bblk(B, L0)
    grid = B // bblk
    N0 = bblk * L0

    # Conv weights: tap-major row blocks [3*Co, Ci] (tap k rows = w[:, :, k]).
    w1s = jnp.transpose(w1, (2, 0, 1)).reshape(3 * h0, C_in).astype(bf16)
    w2s = jnp.transpose(w2, (2, 0, 1)).reshape(3 * h1, h0).astype(bf16)

    # Deconv weights (PyTorch ConvTranspose1d weight is [Ci, Co, K]):
    # stacked rows with each tap block padded to a multiple of 8 sublanes so
    # the in-kernel slices stay tile-aligned.
    def stack_deconv(w):
        ci, co, _ = w.shape
        p = _pad8(co)
        out = jnp.zeros((2 * p, ci), dtype=f32)
        out = out.at[0:co].set(w[:, :, 0].T)
        out = out.at[p:p + co].set(w[:, :, 1].T)
        return out.astype(bf16)

    d1s = stack_deconv(d1)        # [2*pad8(h0), h1]
    d2s = stack_deconv(d2)        # [2*pad8(Cin), h0]

    b1c = b1.reshape(h0, 1).astype(f32)
    b2c = b2.reshape(h1, 1).astype(f32)
    bd1c = bd1.reshape(h0, 1).astype(f32)
    bd2c = bd2.reshape(C_in, 1).astype(f32)

    mp0, mn0 = _edge_masks(L0, bblk, f32)
    mp1, mn1 = _edge_masks(L1, bblk, f32)
    p0 = _pool_select_mat(L0, bblk, bf16)            # [N0, N1]
    p1 = _pool_select_mat(L1, bblk, bf16)            # [N1, N2]
    u1e = _upsample_mat(L2, L3, bblk, 0, bf16)       # [N2, N3]
    u1o = _upsample_mat(L2, L3, bblk, 1, bf16)
    u2e = _upsample_mat(L3, L0, bblk, 0, bf16)       # [N3, N0] (pad folded in)
    u2o = _upsample_mat(L3, L0, bblk, 1, bf16)

    # Fold batch into the lane axis: [B, Cin, L0] -> [Cin, B*L0].
    x2d = jnp.transpose(x, (1, 0, 2)).reshape(C_in, B * L0).astype(f32)

    consts = [w1s, b1c, w2s, b2c, d1s, bd1c, d2s, bd2c,
              mp0, mn0, mp1, mn1, p0, p1, u1e, u1o, u2e, u2o]

    def cspec(arr):
        return pl.BlockSpec(arr.shape, lambda i: (0, 0))

    # Explicit (generous) VMEM budget so larger sequence lengths still compile
    # on the smaller scoped-VMEM defaults of v5e/v7x.
    const_bytes = sum(int(a.size) * a.dtype.itemsize for a in consts)
    io_bytes = 2 * C_in * N0 * 4
    vmem_limit = int(min(64 * 2 ** 20,
                         max(32 * 2 ** 20, 8 * (const_bytes + io_bytes))))

    kernel = functools.partial(_cnn_ae_kernel, c_in=C_in, h0=h0, h1=h1)

    out2d = pl.pallas_call(
        kernel,
        out_shape=jax.ShapeDtypeStruct((C_in, B * L0), x.dtype),
        grid_spec=pltpu.PrefetchScalarGridSpec(
            num_scalar_prefetch=0,
            grid=(grid,),
            in_specs=[pl.BlockSpec((C_in, N0), lambda i: (0, i))]
                     + [cspec(a) for a in consts],
            out_specs=pl.BlockSpec((C_in, N0), lambda i: (0, i)),
        ),
        compiler_params=pltpu.CompilerParams(
            dimension_semantics=("parallel",),
            vmem_limit_bytes=vmem_limit),
    )(x2d, *consts)

    # Crop/pad is already folded into u2e/u2o: output is exactly length L0.
    return out2d.reshape(C_in, B, L0).transpose(1, 0, 2)


# --------------------------------------------------------------------------
# Plain-JAX reference (same math as the PyTorch module) + deterministic init.
# --------------------------------------------------------------------------
def _ref_forward(x, params):
    def conv1d_same(a, w, b):               # a [B,Ci,L], w [Co,Ci,3]
        L = a.shape[-1]
        ap = jnp.pad(a, ((0, 0), (0, 0), (1, 1)))
        y = sum(jnp.einsum("oc,bcl->bol", w[:, :, k], ap[:, :, k:k + L])
                for k in range(3))
        return y + b[None, :, None]

    def maxpool2(a):
        B, C, L = a.shape
        Lp = L // 2
        return jnp.max(a[:, :, :2 * Lp].reshape(B, C, Lp, 2), axis=-1)

    def convT2(a, w, b):                    # a [B,Ci,L], w [Ci,Co,2], stride 2
        B, Ci, L = a.shape
        Co = w.shape[1]
        e = jnp.einsum("iok,bil->bolk", w, a)        # [B,Co,L,2]
        return e.reshape(B, Co, 2 * L) + b[None, :, None]

    h = jax.nn.relu(conv1d_same(x, params["conv1_w"], params["conv1_b"]))
    h = maxpool2(h)
    h = jax.nn.relu(conv1d_same(h, params["conv2_w"], params["conv2_b"]))
    h = maxpool2(h)
    h = jax.nn.relu(convT2(h, params["deconv1_w"], params["deconv1_b"]))
    dec = convT2(h, params["deconv2_w"], params["deconv2_b"])
    L0 = x.shape[-1]
    if dec.shape[-1] > L0:
        dec = dec[:, :, :L0]
    elif dec.shape[-1] < L0:
        dec = jnp.pad(dec, ((0, 0), (0, 0), (0, L0 - dec.shape[-1])))
    return dec


def init_params(key, input_channels=1, hidden_dims=(16, 32), dtype=jnp.float32):
    h0, h1 = hidden_dims
    ks = jax.random.split(key, 8)

    def u(k, shape, fan_in):
        bound = float(fan_in) ** -0.5
        return jax.random.uniform(k, shape, dtype=dtype, minval=-bound, maxval=bound)

    return {
        "conv1_w": u(ks[0], (h0, input_channels, 3), input_channels * 3),
        "conv1_b": u(ks[1], (h0,), input_channels * 3),
        "conv2_w": u(ks[2], (h1, h0, 3), h0 * 3),
        "conv2_b": u(ks[3], (h1,), h0 * 3),
        "deconv1_w": u(ks[4], (h1, h0, 2), h1 * 2),
        "deconv1_b": u(ks[5], (h0,), h1 * 2),
        "deconv2_w": u(ks[6], (h0, input_channels, 2), h0 * 2),
        "deconv2_b": u(ks[7], (input_channels,), h0 * 2),
    }


if __name__ == "__main__":
    key = jax.random.PRNGKey(0)
    kx, kp = jax.random.split(key)

    batch, input_channels, sequence_length = 4, 1, 128
    hidden_dims = (16, 32)

    x = jax.random.normal(kx, (batch, input_channels, sequence_length),
                          dtype=jnp.float32)
    params = init_params(kp, input_channels, hidden_dims)

    out = cnn_autoencoder_forward(x, params)
    out = jax.block_until_ready(out)

    ref = _ref_forward(x, params)
    assert out.shape == x.shape, (out.shape, x.shape)
    max_err = float(jnp.max(jnp.abs(out - ref)))
    # Matmul operands run in bf16 (MXU-native) with f32 accumulation, so allow
    # bf16-level rounding relative to the f32 reference.
    assert jnp.allclose(out, ref, atol=2e-2, rtol=2e-2), max_err

    print("KERNEL_OK")
</pallas_src>

<mosaic_0001>
module attributes {stable_mosaic.version = 11 : i64} {
  func.func @_cnn_ae_kernel(%arg0: i32, %arg1: memref<1x256xf32, #tpu.memory_space<vmem>>, %arg2: memref<48x1xbf16, #tpu.memory_space<vmem>>, %arg3: memref<16x1xf32, #tpu.memory_space<vmem>>, %arg4: memref<96x16xbf16, #tpu.memory_space<vmem>>, %arg5: memref<32x1xf32, #tpu.memory_space<vmem>>, %arg6: memref<32x32xbf16, #tpu.memory_space<vmem>>, %arg7: memref<16x1xf32, #tpu.memory_space<vmem>>, %arg8: memref<16x16xbf16, #tpu.memory_space<vmem>>, %arg9: memref<1x1xf32, #tpu.memory_space<vmem>>, %arg10: memref<1x256xf32, #tpu.memory_space<vmem>>, %arg11: memref<1x256xf32, #tpu.memory_space<vmem>>, %arg12: memref<1x128xf32, #tpu.memory_space<vmem>>, %arg13: memref<1x128xf32, #tpu.memory_space<vmem>>, %arg14: memref<256x128xbf16, #tpu.memory_space<vmem>>, %arg15: memref<128x64xbf16, #tpu.memory_space<vmem>>, %arg16: memref<64x128xbf16, #tpu.memory_space<vmem>>, %arg17: memref<64x128xbf16, #tpu.memory_space<vmem>>, %arg18: memref<128x256xbf16, #tpu.memory_space<vmem>>, %arg19: memref<128x256xbf16, #tpu.memory_space<vmem>>, %arg20: memref<1x256xf32, #tpu.memory_space<vmem>>) attributes {dimension_semantics = [#tpu.dimension_semantics<parallel>], iteration_bounds = array<i64: 2>, scalar_prefetch = 0 : i64, scratch_operands = 0 : i64, tpu.core_type = #tpu.core_type<tc>, window_params = [{transform_indices = @transform_0, window_bounds = array<i64: 1, 256>}, {pipeline_mode = #tpu.pipeline_mode<synchronous>, transform_indices = @transform_1, window_bounds = array<i64: 48, 1>}, {pipeline_mode = #tpu.pipeline_mode<synchronous>, transform_indices = @transform_2, window_bounds = array<i64: 16, 1>}, {pipeline_mode = #tpu.pipeline_mode<synchronous>, transform_indices = @transform_3, window_bounds = array<i64: 96, 16>}, {pipeline_mode = #tpu.pipeline_mode<synchronous>, transform_indices = @transform_4, window_bounds = array<i64: 32, 1>}, {pipeline_mode = #tpu.pipeline_mode<synchronous>, transform_indices = @transform_5, window_bounds = array<i64: 32, 32>}, {pipeline_mode = #tpu.pipeline_mode<synchronous>, transform_indices = @transform_6, window_bounds = array<i64: 16, 1>}, {pipeline_mode = #tpu.pipeline_mode<synchronous>, transform_indices = @transform_7, window_bounds = array<i64: 16, 16>}, {pipeline_mode = #tpu.pipeline_mode<synchronous>, transform_indices = @transform_8, window_bounds = array<i64: 1, 1>}, {pipeline_mode = #tpu.pipeline_mode<synchronous>, transform_indices = @transform_9, window_bounds = array<i64: 1, 256>}, {pipeline_mode = #tpu.pipeline_mode<synchronous>, transform_indices = @transform_10, window_bounds = array<i64: 1, 256>}, {pipeline_mode = #tpu.pipeline_mode<synchronous>, transform_indices = @transform_11, window_bounds = array<i64: 1, 128>}, {pipeline_mode = #tpu.pipeline_mode<synchronous>, transform_indices = @transform_12, window_bounds = array<i64: 1, 128>}, {pipeline_mode = #tpu.pipeline_mode<synchronous>, transform_indices = @transform_13, window_bounds = array<i64: 256, 128>}, {pipeline_mode = #tpu.pipeline_mode<synchronous>, transform_indices = @transform_14, window_bounds = array<i64: 128, 64>}, {pipeline_mode = #tpu.pipeline_mode<synchronous>, transform_indices = @transform_15, window_bounds = array<i64: 64, 128>}, {pipeline_mode = #tpu.pipeline_mode<synchronous>, transform_indices = @transform_16, window_bounds = array<i64: 64, 128>}, {pipeline_mode = #tpu.pipeline_mode<synchronous>, transform_indices = @transform_17, window_bounds = array<i64: 128, 256>}, {pipeline_mode = #tpu.pipeline_mode<synchronous>, transform_indices = @transform_18, window_bounds = array<i64: 128, 256>}, {transform_indices = @transform_19, window_bounds = array<i64: 1, 256>}]} {
    %c0 = arith.constant 0 : index
    %c0_0 = arith.constant 0 : index
    %0 = vector.load %arg1[%c0, %c0_0] : memref<1x256xf32, #tpu.memory_space<vmem>>, vector<1x256xf32>
    %c0_1 = arith.constant 0 : index
    %c0_2 = arith.constant 0 : index
    %1 = vector.load %arg2[%c0_1, %c0_2] : memref<48x1xbf16, #tpu.memory_space<vmem>>, vector<48x1xbf16>
    %2 = arith.truncf %0 : vector<1x256xf32> to vector<1x256xbf16>
    %cst = arith.constant dense<0.000000e+00> : vector<48x256xf32>
    %3 = tpu.matmul %1, %2, %cst {dimension_numbers = #tpu.dot_dimension_numbers<[1], [0], [0], [1], [0, 0, 1, 1], [], []>} : vector<48x1xbf16>, vector<1x256xbf16>, vector<48x256xf32> -> vector<48x256xf32>
    %4 = vector.extract_strided_slice %3 {offsets = [0, 0], sizes = [16, 256], strides = [1, 1]} : vector<48x256xf32> to vector<16x256xf32>
    %5 = vector.extract_strided_slice %3 {offsets = [16, 0], sizes = [16, 256], strides = [1, 1]} : vector<48x256xf32> to vector<16x256xf32>
    %6 = vector.extract_strided_slice %3 {offsets = [32, 0], sizes = [16, 256], strides = [1, 1]} : vector<48x256xf32> to vector<16x256xf32>
    %c1_i32 = arith.constant 1 : i32
    %7 = tpu.dynamic_rotate %4 by %c1_i32 dim 1 : vector<16x256xf32>, i32 -> vector<16x256xf32>
    %c0_3 = arith.constant 0 : index
    %c0_4 = arith.constant 0 : index
    %8 = vector.load %arg10[%c0_3, %c0_4] : memref<1x256xf32, #tpu.memory_space<vmem>>, vector<1x256xf32>
    %9 = vector.broadcast %8 : vector<1x256xf32> to vector<16x256xf32>
    %10 = arith.mulf %7, %9 : vector<16x256xf32>
    %11 = arith.addf %10, %5 : vector<16x256xf32>
    %c255_i32 = arith.constant 255 : i32
    %12 = tpu.dynamic_rotate %6 by %c255_i32 dim 1 : vector<16x256xf32>, i32 -> vector<16x256xf32>
    %c0_5 = arith.constant 0 : index
    %c0_6 = arith.constant 0 : index
    %13 = vector.load %arg11[%c0_5, %c0_6] : memref<1x256xf32, #tpu.memory_space<vmem>>, vector<1x256xf32>
    %14 = vector.broadcast %13 : vector<1x256xf32> to vector<16x256xf32>
    %15 = arith.mulf %12, %14 : vector<16x256xf32>
    %16 = arith.addf %11, %15 : vector<16x256xf32>
    %c0_7 = arith.constant 0 : index
    %c0_8 = arith.constant 0 : index
    %17 = vector.load %arg3[%c0_7, %c0_8] : memref<16x1xf32, #tpu.memory_space<vmem>>, vector<16x1xf32>
    %18 = vector.broadcast %17 : vector<16x1xf32> to vector<16x256xf32>
    %19 = arith.addf %16, %18 : vector<16x256xf32>
    %cst_9 = arith.constant 0.000000e+00 : f32
    %20 = vector.broadcast %cst_9 : f32 to vector<16x256xf32>
    %21 = arith.maximumf %19, %20 : vector<16x256xf32>
    %c255_i32_10 = arith.constant 255 : i32
    %22 = tpu.dynamic_rotate %21 by %c255_i32_10 dim 1 : vector<16x256xf32>, i32 -> vector<16x256xf32>
    %23 = arith.maximumf %21, %22 : vector<16x256xf32>
    %24 = arith.truncf %23 : vector<16x256xf32> to vector<16x256xbf16>
    %c0_11 = arith.constant 0 : index
    %c0_12 = arith.constant 0 : index
    %25 = vector.load %arg14[%c0_11, %c0_12] : memref<256x128xbf16, #tpu.memory_space<vmem>>, vector<256x128xbf16>
    %cst_13 = arith.constant dense<0.000000e+00> : vector<16x128xf32>
    %26 = tpu.matmul %24, %25, %cst_13 {dimension_numbers = #tpu.dot_dimension_numbers<[1], [0], [0], [1], [0, 0, 1, 1], [], []>} : vector<16x256xbf16>, vector<256x128xbf16>, vector<16x128xf32> -> vector<16x128xf32>
    %c0_14 = arith.constant 0 : index
    %c0_15 = arith.constant 0 : index
    %27 = vector.load %arg4[%c0_14, %c0_15] : memref<96x16xbf16, #tpu.memory_space<vmem>>, vector<96x16xbf16>
    %28 = arith.truncf %26 : vector<16x128xf32> to vector<16x128xbf16>
    %cst_16 = arith.constant dense<0.000000e+00> : vector<96x128xf32>
    %29 = tpu.matmul %27, %28, %cst_16 {dimension_numbers = #tpu.dot_dimension_numbers<[1], [0], [0], [1], [0, 0, 1, 1], [], []>} : vector<96x16xbf16>, vector<16x128xbf16>, vector<96x128xf32> -> vector<96x128xf32>
    %30 = vector.extract_strided_slice %29 {offsets = [0, 0], sizes = [32, 128], strides = [1, 1]} : vector<96x128xf32> to vector<32x128xf32>
    %31 = vector.extract_strided_slice %29 {offsets = [32, 0], sizes = [32, 128], strides = [1, 1]} : vector<96x128xf32> to vector<32x128xf32>
    %32 = vector.extract_strided_slice %29 {offsets = [64, 0], sizes = [32, 128], strides = [1, 1]} : vector<96x128xf32> to vector<32x128xf32>
    %c1_i32_17 = arith.constant 1 : i32
    %33 = tpu.dynamic_rotate %30 by %c1_i32_17 dim 1 : vector<32x128xf32>, i32 -> vector<32x128xf32>
    %c0_18 = arith.constant 0 : index
    %c0_19 = arith.constant 0 : index
    %34 = vector.load %arg12[%c0_18, %c0_19] : memref<1x128xf32, #tpu.memory_space<vmem>>, vector<1x128xf32>
    %35 = vector.broadcast %34 : vector<1x128xf32> to vector<32x128xf32>
    %36 = arith.mulf %33, %35 : vector<32x128xf32>
    %37 = arith.addf %36, %31 : vector<32x128xf32>
    %c127_i32 = arith.constant 127 : i32
    %38 = tpu.dynamic_rotate %32 by %c127_i32 dim 1 : vector<32x128xf32>, i32 -> vector<32x128xf32>
    %c0_20 = arith.constant 0 : index
    %c0_21 = arith.constant 0 : index
    %39 = vector.load %arg13[%c0_20, %c0_21] : memref<1x128xf32, #tpu.memory_space<vmem>>, vector<1x128xf32>
    %40 = vector.broadcast %39 : vector<1x128xf32> to vector<32x128xf32>
    %41 = arith.mulf %38, %40 : vector<32x128xf32>
    %42 = arith.addf %37, %41 : vector<32x128xf32>
    %c0_22 = arith.constant 0 : index
    %c0_23 = arith.constant 0 : index
    %43 = vector.load %arg5[%c0_22, %c0_23] : memref<32x1xf32, #tpu.memory_space<vmem>>, vector<32x1xf32>
    %44 = vector.broadcast %43 : vector<32x1xf32> to vector<32x128xf32>
    %45 = arith.addf %42, %44 : vector<32x128xf32>
    %cst_24 = arith.constant 0.000000e+00 : f32
    %46 = vector.broadcast %cst_24 : f32 to vector<32x128xf32>
    %47 = arith.maximumf %45, %46 : vector<32x128xf32>
    %c127_i32_25 = arith.constant 127 : i32
    %48 = tpu.dynamic_rotate %47 by %c127_i32_25 dim 1 : vector<32x128xf32>, i32 -> vector<32x128xf32>
    %49 = arith.maximumf %47, %48 : vector<32x128xf32>
    %50 = arith.truncf %49 : vector<32x128xf32> to vector<32x128xbf16>
    %c0_26 = arith.constant 0 : index
    %c0_27 = arith.constant 0 : index
    %51 = vector.load %arg15[%c0_26, %c0_27] : memref<128x64xbf16, #tpu.memory_space<vmem>>, vector<128x64xbf16>
    %cst_28 = arith.constant dense<0.000000e+00> : vector<32x64xf32>
    %52 = tpu.matmul %50, %51, %cst_28 {dimension_numbers = #tpu.dot_dimension_numbers<[1], [0], [0], [1], [0, 0, 1, 1], [], []>} : vector<32x128xbf16>, vector<128x64xbf16>, vector<32x64xf32> -> vector<32x64xf32>
    %c0_29 = arith.constant 0 : index
    %c0_30 = arith.constant 0 : index
    %53 = vector.load %arg6[%c0_29, %c0_30] : memref<32x32xbf16, #tpu.memory_space<vmem>>, vector<32x32xbf16>
    %54 = arith.truncf %52 : vector<32x64xf32> to vector<32x64xbf16>
    %cst_31 = arith.constant dense<0.000000e+00> : vector<32x64xf32>
    %55 = tpu.matmul %53, %54, %cst_31 {dimension_numbers = #tpu.dot_dimension_numbers<[1], [0], [0], [1], [0, 0, 1, 1], [], []>} : vector<32x32xbf16>, vector<32x64xbf16>, vector<32x64xf32> -> vector<32x64xf32>
    %c0_32 = arith.constant 0 : index
    %c0_33 = arith.constant 0 : index
    %56 = vector.load %arg7[%c0_32, %c0_33] : memref<16x1xf32, #tpu.memory_space<vmem>>, vector<16x1xf32>
    %57 = vector.extract_strided_slice %55 {offsets = [0, 0], sizes = [16, 64], strides = [1, 1]} : vector<32x64xf32> to vector<16x64xf32>
    %58 = vector.broadcast %56 : vector<16x1xf32> to vector<16x64xf32>
    %59 = arith.addf %57, %58 : vector<16x64xf32>
    %60 = arith.truncf %59 : vector<16x64xf32> to vector<16x64xbf16>
    %61 = vector.extract_strided_slice %55 {offsets = [16, 0], sizes = [16, 64], strides = [1, 1]} : vector<32x64xf32> to vector<16x64xf32>
    %62 = vector.broadcast %56 : vector<16x1xf32> to vector<16x64xf32>
    %63 = arith.addf %61, %62 : vector<16x64xf32>
    %64 = arith.truncf %63 : vector<16x64xf32> to vector<16x64xbf16>
    %c0_34 = arith.constant 0 : index
    %c0_35 = arith.constant 0 : index
    %65 = vector.load %arg16[%c0_34, %c0_35] : memref<64x128xbf16, #tpu.memory_space<vmem>>, vector<64x128xbf16>
    %cst_36 = arith.constant dense<0.000000e+00> : vector<16x128xf32>
    %66 = tpu.matmul %60, %65, %cst_36 {dimension_numbers = #tpu.dot_dimension_numbers<[1], [0], [0], [1], [0, 0, 1, 1], [], []>} : vector<16x64xbf16>, vector<64x128xbf16>, vector<16x128xf32> -> vector<16x128xf32>
    %c0_37 = arith.constant 0 : index
    %c0_38 = arith.constant 0 : index
    %67 = vector.load %arg17[%c0_37, %c0_38] : memref<64x128xbf16, #tpu.memory_space<vmem>>, vector<64x128xbf16>
    %cst_39 = arith.constant dense<0.000000e+00> : vector<16x128xf32>
    %68 = tpu.matmul %64, %67, %cst_39 {dimension_numbers = #tpu.dot_dimension_numbers<[1], [0], [0], [1], [0, 0, 1, 1], [], []>} : vector<16x64xbf16>, vector<64x128xbf16>, vector<16x128xf32> -> vector<16x128xf32>
    %69 = arith.addf %66, %68 : vector<16x128xf32>
    %cst_40 = arith.constant 0.000000e+00 : f32
    %70 = vector.broadcast %cst_40 : f32 to vector<16x128xf32>
    %71 = arith.maximumf %69, %70 : vector<16x128xf32>
    %c0_41 = arith.constant 0 : index
    %c0_42 = arith.constant 0 : index
    %72 = vector.load %arg8[%c0_41, %c0_42] : memref<16x16xbf16, #tpu.memory_space<vmem>>, vector<16x16xbf16>
    %73 = arith.truncf %71 : vector<16x128xf32> to vector<16x128xbf16>
    %cst_43 = arith.constant dense<0.000000e+00> : vector<16x128xf32>
    %74 = tpu.matmul %72, %73, %cst_43 {dimension_numbers = #tpu.dot_dimension_numbers<[1], [0], [0], [1], [0, 0, 1, 1], [], []>} : vector<16x16xbf16>, vector<16x128xbf16>, vector<16x128xf32> -> vector<16x128xf32>
    %c0_44 = arith.constant 0 : index
    %c0_45 = arith.constant 0 : index
    %75 = vector.load %arg9[%c0_44, %c0_45] : memref<1x1xf32, #tpu.memory_space<vmem>>, vector<1x1xf32>
    %76 = vector.extract_strided_slice %74 {offsets = [0, 0], sizes = [1, 128], strides = [1, 1]} : vector<16x128xf32> to vector<1x128xf32>
    %77 = vector.broadcast %75 : vector<1x1xf32> to vector<1x128xf32>
    %78 = arith.addf %76, %77 : vector<1x128xf32>
    %79 = arith.truncf %78 : vector<1x128xf32> to vector<1x128xbf16>
    %80 = vector.extract_strided_slice %74 {offsets = [8, 0], sizes = [1, 128], strides = [1, 1]} : vector<16x128xf32> to vector<1x128xf32>
    %81 = vector.broadcast %75 : vector<1x1xf32> to vector<1x128xf32>
    %82 = arith.addf %80, %81 : vector<1x128xf32>
    %83 = arith.truncf %82 : vector<1x128xf32> to vector<1x128xbf16>
    %c0_46 = arith.constant 0 : index
    %c0_47 = arith.constant 0 : index
    %84 = vector.load %arg18[%c0_46, %c0_47] : memref<128x256xbf16, #tpu.memory_space<vmem>>, vector<128x256xbf16>
    %cst_48 = arith.constant dense<0.000000e+00> : vector<1x256xf32>
    %85 = tpu.matmul %79, %84, %cst_48 {dimension_numbers = #tpu.dot_dimension_numbers<[1], [0], [0], [1], [0, 0, 1, 1], [], []>} : vector<1x128xbf16>, vector<128x256xbf16>, vector<1x256xf32> -> vector<1x256xf32>
    %c0_49 = arith.constant 0 : index
    %c0_50 = arith.constant 0 : index
    %86 = vector.load %arg19[%c0_49, %c0_50] : memref<128x256xbf16, #tpu.memory_space<vmem>>, vector<128x256xbf16>
    %cst_51 = arith.constant dense<0.000000e+00> : vector<1x256xf32>
    %87 = tpu.matmul %83, %86, %cst_51 {dimension_numbers = #tpu.dot_dimension_numbers<[1], [0], [0], [1], [0, 0, 1, 1], [], []>} : vector<1x128xbf16>, vector<128x256xbf16>, vector<1x256xf32> -> vector<1x256xf32>
    %88 = arith.addf %85, %87 : vector<1x256xf32>
    %c0_52 = arith.constant 0 : index
    %c0_53 = arith.constant 0 : index
    %89 = vector.load %arg20[%c0_52, %c0_53] : memref<1x256xf32, #tpu.memory_space<vmem>>, vector<1x256xf32>
    tpu.vector_store %arg20[%c0_52, %c0_53], %88 {strides = array<i32>} : memref<1x256xf32, #tpu.memory_space<vmem>>, vector<1x256xf32>,
    return
  }
  func.func @transform_0(%arg0: i32) -> (i32, i32) {
    %c0_i32 = arith.constant 0 : i32
    %c0_i32_0 = arith.constant 0 : i32
    return %c0_i32, %arg0 : i32, i32
  }
  func.func @transform_1(%arg0: i32) -> (i32, i32) {
    %c0_i32 = arith.constant 0 : i32
    %c0_i32_0 = arith.constant 0 : i32
    %c0_i32_1 = arith.constant 0 : i32
    return %c0_i32, %c0_i32_0 : i32, i32
  }
  func.func @transform_2(%arg0: i32) -> (i32, i32) {
    %c0_i32 = arith.constant 0 : i32
    %c0_i32_0 = arith.constant 0 : i32
    %c0_i32_1 = arith.constant 0 : i32
    return %c0_i32, %c0_i32_0 : i32, i32
  }
  func.func @transform_3(%arg0: i32) -> (i32, i32) {
    %c0_i32 = arith.constant 0 : i32
    %c0_i32_0 = arith.constant 0 : i32
    %c0_i32_1 = arith.constant 0 : i32
    return %c0_i32, %c0_i32_0 : i32, i32
  }
  func.func @transform_4(%arg0: i32) -> (i32, i32) {
    %c0_i32 = arith.constant 0 : i32
    %c0_i32_0 = arith.constant 0 : i32
    %c0_i32_1 = arith.constant 0 : i32
    return %c0_i32, %c0_i32_0 : i32, i32
  }
  func.func @transform_5(%arg0: i32) -> (i32, i32) {
    %c0_i32 = arith.constant 0 : i32
    %c0_i32_0 = arith.constant 0 : i32
    %c0_i32_1 = arith.constant 0 : i32
    return %c0_i32, %c0_i32_0 : i32, i32
  }
  func.func @transform_6(%arg0: i32) -> (i32, i32) {
    %c0_i32 = arith.constant 0 : i32
    %c0_i32_0 = arith.constant 0 : i32
    %c0_i32_1 = arith.constant 0 : i32
    return %c0_i32, %c0_i32_0 : i32, i32
  }
  func.func @transform_7(%arg0: i32) -> (i32, i32) {
    %c0_i32 = arith.constant 0 : i32
    %c0_i32_0 = arith.constant 0 : i32
    %c0_i32_1 = arith.constant 0 : i32
    return %c0_i32, %c0_i32_0 : i32, i32
  }
  func.func @transform_8(%arg0: i32) -> (i32, i32) {
    %c0_i32 = arith.constant 0 : i32
    %c0_i32_0 = arith.constant 0 : i32
    %c0_i32_1 = arith.constant 0 : i32
    return %c0_i32, %c0_i32_0 : i32, i32
  }
  func.func @transform_9(%arg0: i32) -> (i32, i32) {
    %c0_i32 = arith.constant 0 : i32
    %c0_i32_0 = arith.constant 0 : i32
    %c0_i32_1 = arith.constant 0 : i32
    return %c0_i32, %c0_i32_0 : i32, i32
  }
  func.func @transform_10(%arg0: i32) -> (i32, i32) {
    %c0_i32 = arith.constant 0 : i32
    %c0_i32_0 = arith.constant 0 : i32
    %c0_i32_1 = arith.constant 0 : i32
    return %c0_i32, %c0_i32_0 : i32, i32
  }
  func.func @transform_11(%arg0: i32) -> (i32, i32) {
    %c0_i32 = arith.constant 0 : i32
    %c0_i32_0 = arith.constant 0 : i32
    %c0_i32_1 = arith.constant 0 : i32
    return %c0_i32, %c0_i32_0 : i32, i32
  }
  func.func @transform_12(%arg0: i32) -> (i32, i32) {
    %c0_i32 = arith.constant 0 : i32
    %c0_i32_0 = arith.constant 0 : i32
    %c0_i32_1 = arith.constant 0 : i32
    return %c0_i32, %c0_i32_0 : i32, i32
  }
  func.func @transform_13(%arg0: i32) -> (i32, i32) {
    %c0_i32 = arith.constant 0 : i32
    %c0_i32_0 = arith.constant 0 : i32
    %c0_i32_1 = arith.constant 0 : i32
    return %c0_i32, %c0_i32_0 : i32, i32
  }
  func.func @transform_14(%arg0: i32) -> (i32, i32) {
    %c0_i32 = arith.constant 0 : i32
    %c0_i32_0 = arith.constant 0 : i32
    %c0_i32_1 = arith.constant 0 : i32
    return %c0_i32, %c0_i32_0 : i32, i32
  }
  func.func @transform_15(%arg0: i32) -> (i32, i32) {
    %c0_i32 = arith.constant 0 : i32
    %c0_i32_0 = arith.constant 0 : i32
    %c0_i32_1 = arith.constant 0 : i32
    return %c0_i32, %c0_i32_0 : i32, i32
  }
  func.func @transform_16(%arg0: i32) -> (i32, i32) {
    %c0_i32 = arith.constant 0 : i32
    %c0_i32_0 = arith.constant 0 : i32
    %c0_i32_1 = arith.constant 0 : i32
    return %c0_i32, %c0_i32_0 : i32, i32
  }
  func.func @transform_17(%arg0: i32) -> (i32, i32) {
    %c0_i32 = arith.constant 0 : i32
    %c0_i32_0 = arith.constant 0 : i32
    %c0_i32_1 = arith.constant 0 : i32
    return %c0_i32, %c0_i32_0 : i32, i32
  }
  func.func @transform_18(%arg0: i32) -> (i32, i32) {
    %c0_i32 = arith.constant 0 : i32
    %c0_i32_0 = arith.constant 0 : i32
    %c0_i32_1 = arith.constant 0 : i32
    return %c0_i32, %c0_i32_0 : i32, i32
  }
  func.func @transform_19(%arg0: i32) -> (i32, i32) {
    %c0_i32 = arith.constant 0 : i32
    %c0_i32_0 = arith.constant 0 : i32
    return %c0_i32, %arg0 : i32, i32
  }
}

</mosaic_0001>

<llo_original>
// kernel: tpu_custom_call.1
$region0: #{tpu_custom_call.1}
  #allocation0 [shape = 'u32[]', space=smem, size = 0x4, offset = 0x4, fixed_abs, tag = 'smem constant byte address 0x4 - core index']
  #allocation1 [shape = 'u32[72,128]{1,0:T(1,128)}', space=vmem, size = 0x9000, scoped, tag = 'internal scratch']
  #allocation2 [shape = 'f32[1,1]{1,0:T(1,128)S(1)}', space=vmem, size = 0x200, scoped, tag = 'scoped memory for tpu_custom_call.1']
  %s0 = inlined_call_operand.vmem [shape: f32[1,512], index: 0, kind: input, shape index: {}]
  %s1 = inlined_call_operand.vmem [shape: bf16[48,1], index: 1, kind: input, shape index: {}]
  %s2 = inlined_call_operand.vmem [shape: f32[16,1], index: 2, kind: input, shape index: {}]
  %s3 = inlined_call_operand.vmem [shape: bf16[96,16], index: 3, kind: input, shape index: {}]
  %s4 = inlined_call_operand.vmem [shape: f32[32,1], index: 4, kind: input, shape index: {}]
  %s5 = inlined_call_operand.vmem [shape: bf16[32,32], index: 5, kind: input, shape index: {}]
  %s6 = inlined_call_operand.vmem [shape: f32[16,1], index: 6, kind: input, shape index: {}]
  %s7 = inlined_call_operand.vmem [shape: bf16[16,16], index: 7, kind: input, shape index: {}]
  %s8 = inlined_call_operand.<no memory space> [shape: f32[1,1], index: 8, kind: input, shape index: {}]
  %s9 = inlined_call_operand.vmem [shape: f32[1,256], index: 9, kind: input, shape index: {}]
  %s10 = inlined_call_operand.vmem [shape: f32[1,256], index: 10, kind: input, shape index: {}]
  %s11 = inlined_call_operand.vmem [shape: f32[1,128], index: 11, kind: input, shape index: {}]
  %s12 = inlined_call_operand.vmem [shape: f32[1,128], index: 12, kind: input, shape index: {}]
  %s13 = inlined_call_operand.hbm [shape: bf16[256,128], index: 13, kind: input, shape index: {}]
  %s14 = inlined_call_operand.vmem [shape: bf16[128,64], index: 14, kind: input, shape index: {}]
  %s15 = inlined_call_operand.vmem [shape: bf16[64,128], index: 15, kind: input, shape index: {}]
  %s16 = inlined_call_operand.vmem [shape: bf16[64,128], index: 16, kind: input, shape index: {}]
  %s17 = inlined_call_operand.hbm [shape: bf16[128,256], index: 17, kind: input, shape index: {}]
  %s18 = inlined_call_operand.hbm [shape: bf16[128,256], index: 18, kind: input, shape index: {}]
  %s19 = inlined_call_operand.hbm [shape: f32[1,512], index: 19, kind: output, shape index: {}]
  %s20 = sld [smem:[#allocation0]]
  $region121: #{tpu_custom_call.1} parent=0
    _
  %s22 = ssub.s32 1, %s20
  %s23 = scalar_select 0, %s22, %s20
  %v24 = vstv %s8
  %25 = vst [vmem:[#allocation2] sm:$0x1] %v24
  $region1: #{tpu_custom_call.1} parent=0
    #allocation3 [shape = 'u8[65536]{0}', space=vmem, size = 0x10000, scoped, tag = 'input window, operand 13, single buffered']
    #allocation4 [shape = 's32[2]{0}', space=sflag, size = 0x8, scoped, tag = 'scoped memory for tpu_custom_call.1']
    #allocation5 [shape = 's32[2]{0}', space=sflag, size = 0x8, scoped, tag = 'scoped memory for tpu_custom_call.1']
    #allocation6 [shape = 'u8[65536]{0}', space=vmem, size = 0x10000, scoped, tag = 'input window, operand 17, single buffered']
    #allocation7 [shape = 's32[1]{0}', space=sflag, size = 0x4, scoped, tag = 'scoped memory for tpu_custom_call.1']
    #allocation8 [shape = 'u8[65536]{0}', space=vmem, size = 0x10000, scoped, tag = 'input window, operand 18, single buffered']
    #allocation9 [shape = 'u8[2048]{0}', space=vmem, size = 0x800, scoped, tag = 'output window, operand 0']
    %26 = vsyncpa [#allocation4], 0
    %27 = vsyncpa [#allocation7], 0
    %28 = vsyncpa [#allocation5], 0
    %s29 = scalar_lea.sflag [#allocation5], 1
    %30 = vsyncpa %s29, 0
    loop: start=0, step=1, limit=4
    $region2: #{tpu_custom_call.1} parent=1 // loop_pre_header
      _
    $region3: #{tpu_custom_call.1} parent=1 // loop_header
      %s32 = sphi 0, %s36
      %p33 = scmp.ge.s32.totalorder %s32, 4
      %s42 = sphi 0, %s44
      %s45 = sphi 0, %s42
      %s46 = sphi 0, %s45
      %s62 = sphi 0, %s46
      %s66 = sphi 0, %s66
      %s68 = sphi 0, %s66
      %s69 = sphi 0, %s68
      %s83 = sphi 0, %s69
      %s87 = sphi 0, %s87
      %s89 = sphi 0, %s87
      %s90 = sphi 0, %s89
      %s104 = sphi 0, %s90
      %s108 = sphi 0, %s108
      %s110 = sphi 0, %s108
      %s111 = sphi 0, %s110
      %s125 = sphi 0, %s111
      %s129 = sphi 0, %s129
      %s131 = sphi 0, %s129
      %s132 = sphi 0, %s131
      %s146 = sphi 0, %s132
      %s150 = sphi 0, %s150
      %s152 = sphi 0, %s150
      %s153 = sphi 0, %s152
      %s167 = sphi 0, %s153
      %s171 = sphi 0, %s171
      %s173 = sphi 0, %s171
      %s174 = sphi 0, %s173
      %s188 = sphi 0, %s174
      %s192 = sphi 0, %s192
      %s194 = sphi 0, %s192
      %s195 = sphi 0, %s194
      %s209 = sphi 0, %s195
      %s213 = sphi 0, %s213
      %s215 = sphi 0, %s213
      %s216 = sphi 0, %s215
      %s230 = sphi 0, %s216
      %s234 = sphi 0, %s234
      %s236 = sphi 0, %s234
      %s237 = sphi 0, %s236
      %s251 = sphi 0, %s237
      %s255 = sphi 0, %s255
      %s257 = sphi 0, %s255
      %s258 = sphi 0, %s257
      %s272 = sphi 0, %s258
      %s276 = sphi 0, %s276
      %s278 = sphi 0, %s276
      %s279 = sphi 0, %s278
      %s293 = sphi 0, %s279
      %s297 = sphi 0, %s297
      %s299 = sphi 0, %s297
      %s300 = sphi 0, %s299
      %s314 = sphi 0, %s300
      %s318 = sphi 0, %s318
      %s320 = sphi 0, %s318
      %s321 = sphi 0, %s320
      %s335 = sphi 0, %s321
      %s339 = sphi 0, %s339
      %s341 = sphi 0, %s339
      %s342 = sphi 0, %s341
      %s356 = sphi 0, %s342
      %s360 = sphi 0, %s360
      %s362 = sphi 0, %s360
      %s363 = sphi 0, %s362
      %s377 = sphi 0, %s363
      %s381 = sphi 0, %s381
      %s383 = sphi 0, %s381
      %s384 = sphi 0, %s383
      %s398 = sphi 0, %s384
      %s402 = sphi 0, %s402
      %s404 = sphi 0, %s402
      %s405 = sphi 0, %s404
      %s419 = sphi 0, %s405
      %s423 = sphi 0, %s423
      %s425 = sphi 0, %s423
      %s426 = sphi 0, %s425
      %s440 = sphi 0, %s426
      %s446 = sphi 0, %s448
      %s449 = sphi 0, %s446
      %s450 = sphi 0, %s449
      %s466 = sphi 0, %s450
    $region4: #{tpu_custom_call.1} parent=1 // loop_header_branch
      %35 = sbr.rel (%p33) target = $region8
    $region5: #{tpu_custom_call.1} parent=1 // loop_body
      %s37 = ssub.s32 %s32, 1
      %s38 = ssub.s32 %s32, 2
      %s39 = sadd.s32 %s32, 1
      %s40 = ssub.s32 %s32, %s39
      %p41 = scmp.eq.s32.totalorder %s40, 0
      %s43 = sadd.s32 %s42, 1
      %s44 = scalar_select %p41, %s42, %s43
      %p47 = pneg %p41
      %p48 = scmp.eq.s32.totalorder %s32, 1
      %p49 = por %p47, %p48
      %p50 = scmp.ne.s32.totalorder %s42, %s45
      %p51 = scmp.eq.s32.totalorder %s32, 0
      %p52 = por %p50, %p51
      %p53 = scmp.ne.s32.totalorder %s42, %s45
      %p54 = scmp.eq.s32.totalorder %s37, 1
      %p55 = por %p53, %p54
      %p56 = scmp.ne.s32.totalorder %s45, %s46
      %p57 = scmp.eq.s32.totalorder %s37, 0
      %p58 = por %p56, %p57
      %p59 = scmp.ne.s32.totalorder %s45, %s46
      %p60 = scmp.eq.s32.totalorder %s38, 1
      %p61 = por %p59, %p60
      %p63 = scmp.ne.s32.totalorder %s46, %s62
      %p64 = scmp.eq.s32.totalorder %s38, 0
      %p65 = por %p63, %p64
      %s67 = sadd.s32 %s66, 1
      %p70 = scmp.eq.s32.totalorder %s32, 1
      %p71 = scmp.ne.s32.totalorder %s66, %s68
      %p72 = scmp.eq.s32.totalorder %s32, 0
      %p73 = por %p71, %p72
      %p74 = scmp.ne.s32.totalorder %s66, %s68
      %p75 = scmp.eq.s32.totalorder %s37, 1
      %p76 = por %p74, %p75
      %p77 = scmp.ne.s32.totalorder %s68, %s69
      %p78 = scmp.eq.s32.totalorder %s37, 0
      %p79 = por %p77, %p78
      %p80 = scmp.ne.s32.totalorder %s68, %s69
      %p81 = scmp.eq.s32.totalorder %s38, 1
      %p82 = por %p80, %p81
      %p84 = scmp.ne.s32.totalorder %s69, %s83
      %p85 = scmp.eq.s32.totalorder %s38, 0
      %p86 = por %p84, %p85
      %s88 = sadd.s32 %s87, 1
      %p91 = scmp.eq.s32.totalorder %s32, 1
      %p92 = scmp.ne.s32.totalorder %s87, %s89
      %p93 = scmp.eq.s32.totalorder %s32, 0
      %p94 = por %p92, %p93
      %p95 = scmp.ne.s32.totalorder %s87, %s89
      %p96 = scmp.eq.s32.totalorder %s37, 1
      %p97 = por %p95, %p96
      %p98 = scmp.ne.s32.totalorder %s89, %s90
      %p99 = scmp.eq.s32.totalorder %s37, 0
      %p100 = por %p98, %p99
      %p101 = scmp.ne.s32.totalorder %s89, %s90
      %p102 = scmp.eq.s32.totalorder %s38, 1
      %p103 = por %p101, %p102
      %p105 = scmp.ne.s32.totalorder %s90, %s104
      %p106 = scmp.eq.s32.totalorder %s38, 0
      %p107 = por %p105, %p106
      %s109 = sadd.s32 %s108, 1
      %p112 = scmp.eq.s32.totalorder %s32, 1
      %p113 = scmp.ne.s32.totalorder %s108, %s110
      %p114 = scmp.eq.s32.totalorder %s32, 0
      %p115 = por %p113, %p114
      %p116 = scmp.ne.s32.totalorder %s108, %s110
      %p117 = scmp.eq.s32.totalorder %s37, 1
      %p118 = por %p116, %p117
      %p119 = scmp.ne.s32.totalorder %s110, %s111
      %p120 = scmp.eq.s32.totalorder %s37, 0
      %p121 = por %p119, %p120
      %p122 = scmp.ne.s32.totalorder %s110, %s111
      %p123 = scmp.eq.s32.totalorder %s38, 1
      %p124 = por %p122, %p123
      %p126 = scmp.ne.s32.totalorder %s111, %s125
      %p127 = scmp.eq.s32.totalorder %s38, 0
      %p128 = por %p126, %p127
      %s130 = sadd.s32 %s129, 1
      %p133 = scmp.eq.s32.totalorder %s32, 1
      %p134 = scmp.ne.s32.totalorder %s129, %s131
      %p135 = scmp.eq.s32.totalorder %s32, 0
      %p136 = por %p134, %p135
      %p137 = scmp.ne.s32.totalorder %s129, %s131
      %p138 = scmp.eq.s32.totalorder %s37, 1
      %p139 = por %p137, %p138
      %p140 = scmp.ne.s32.totalorder %s131, %s132
      %p141 = scmp.eq.s32.totalorder %s37, 0
      %p142 = por %p140, %p141
      %p143 = scmp.ne.s32.totalorder %s131, %s132
      %p144 = scmp.eq.s32.totalorder %s38, 1
      %p145 = por %p143, %p144
      %p147 = scmp.ne.s32.totalorder %s132, %s146
      %p148 = scmp.eq.s32.totalorder %s38, 0
      %p149 = por %p147, %p148
      %s151 = sadd.s32 %s150, 1
      %p154 = scmp.eq.s32.totalorder %s32, 1
      %p155 = scmp.ne.s32.totalorder %s150, %s152
      %p156 = scmp.eq.s32.totalorder %s32, 0
      %p157 = por %p155, %p156
      %p158 = scmp.ne.s32.totalorder %s150, %s152
      %p159 = scmp.eq.s32.totalorder %s37, 1
      %p160 = por %p158, %p159
      %p161 = scmp.ne.s32.totalorder %s152, %s153
      %p162 = scmp.eq.s32.totalorder %s37, 0
      %p163 = por %p161, %p162
      %p164 = scmp.ne.s32.totalorder %s152, %s153
      %p165 = scmp.eq.s32.totalorder %s38, 1
      %p166 = por %p164, %p165
      %p168 = scmp.ne.s32.totalorder %s153, %s167
      %p169 = scmp.eq.s32.totalorder %s38, 0
      %p170 = por %p168, %p169
      %s172 = sadd.s32 %s171, 1
      %p175 = scmp.eq.s32.totalorder %s32, 1
      %p176 = scmp.ne.s32.totalorder %s171, %s173
      %p177 = scmp.eq.s32.totalorder %s32, 0
      %p178 = por %p176, %p177
      %p179 = scmp.ne.s32.totalorder %s171, %s173
      %p180 = scmp.eq.s32.totalorder %s37, 1
      %p181 = por %p179, %p180
      %p182 = scmp.ne.s32.totalorder %s173, %s174
      %p183 = scmp.eq.s32.totalorder %s37, 0
      %p184 = por %p182, %p183
      %p185 = scmp.ne.s32.totalorder %s173, %s174
      %p186 = scmp.eq.s32.totalorder %s38, 1
      %p187 = por %p185, %p186
      %p189 = scmp.ne.s32.totalorder %s174, %s188
      %p190 = scmp.eq.s32.totalorder %s38, 0
      %p191 = por %p189, %p190
      %s193 = sadd.s32 %s192, 1
      %p196 = scmp.eq.s32.totalorder %s32, 1
      %p197 = scmp.ne.s32.totalorder %s192, %s194
      %p198 = scmp.eq.s32.totalorder %s32, 0
      %p199 = por %p197, %p198
      %p200 = scmp.ne.s32.totalorder %s192, %s194
      %p201 = scmp.eq.s32.totalorder %s37, 1
      %p202 = por %p200, %p201
      %p203 = scmp.ne.s32.totalorder %s194, %s195
      %p204 = scmp.eq.s32.totalorder %s37, 0
      %p205 = por %p203, %p204
      %p206 = scmp.ne.s32.totalorder %s194, %s195
      %p207 = scmp.eq.s32.totalorder %s38, 1
      %p208 = por %p206, %p207
      %p210 = scmp.ne.s32.totalorder %s195, %s209
      %p211 = scmp.eq.s32.totalorder %s38, 0
      %p212 = por %p210, %p211
      %s214 = sadd.s32 %s213, 1
      %p217 = scmp.eq.s32.totalorder %s32, 1
      %p218 = scmp.ne.s32.totalorder %s213, %s215
      %p219 = scmp.eq.s32.totalorder %s32, 0
      %p220 = por %p218, %p219
      %p221 = scmp.ne.s32.totalorder %s213, %s215
      %p222 = scmp.eq.s32.totalorder %s37, 1
      %p223 = por %p221, %p222
      %p224 = scmp.ne.s32.totalorder %s215, %s216
      %p225 = scmp.eq.s32.totalorder %s37, 0
      %p226 = por %p224, %p225
      %p227 = scmp.ne.s32.totalorder %s215, %s216
      %p228 = scmp.eq.s32.totalorder %s38, 1
      %p229 = por %p227, %p228
      %p231 = scmp.ne.s32.totalorder %s216, %s230
      %p232 = scmp.eq.s32.totalorder %s38, 0
      %p233 = por %p231, %p232
      %s235 = sadd.s32 %s234, 1
      %p238 = scmp.eq.s32.totalorder %s32, 1
      %p239 = scmp.ne.s32.totalorder %s234, %s236
      %p240 = scmp.eq.s32.totalorder %s32, 0
      %p241 = por %p239, %p240
      %p242 = scmp.ne.s32.totalorder %s234, %s236
      %p243 = scmp.eq.s32.totalorder %s37, 1
      %p244 = por %p242, %p243
      %p245 = scmp.ne.s32.totalorder %s236, %s237
      %p246 = scmp.eq.s32.totalorder %s37, 0
      %p247 = por %p245, %p246
      %p248 = scmp.ne.s32.totalorder %s236, %s237
      %p249 = scmp.eq.s32.totalorder %s38, 1
      %p250 = por %p248, %p249
      %p252 = scmp.ne.s32.totalorder %s237, %s251
      %p253 = scmp.eq.s32.totalorder %s38, 0
      %p254 = por %p252, %p253
      %s256 = sadd.s32 %s255, 1
      %p259 = scmp.eq.s32.totalorder %s32, 1
      %p260 = scmp.ne.s32.totalorder %s255, %s257
      %p261 = scmp.eq.s32.totalorder %s32, 0
      %p262 = por %p260, %p261
      %p263 = scmp.ne.s32.totalorder %s255, %s257
      %p264 = scmp.eq.s32.totalorder %s37, 1
      %p265 = por %p263, %p264
      %p266 = scmp.ne.s32.totalorder %s257, %s258
      %p267 = scmp.eq.s32.totalorder %s37, 0
      %p268 = por %p266, %p267
      %p269 = scmp.ne.s32.totalorder %s257, %s258
      %p270 = scmp.eq.s32.totalorder %s38, 1
      %p271 = por %p269, %p270
      %p273 = scmp.ne.s32.totalorder %s258, %s272
      %p274 = scmp.eq.s32.totalorder %s38, 0
      %p275 = por %p273, %p274
      %s277 = sadd.s32 %s276, 1
      %p280 = scmp.eq.s32.totalorder %s32, 1
      %p281 = scmp.ne.s32.totalorder %s276, %s278
      %p282 = scmp.eq.s32.totalorder %s32, 0
      %p283 = por %p281, %p282
      %p284 = scmp.ne.s32.totalorder %s276, %s278
      %p285 = scmp.eq.s32.totalorder %s37, 1
      %p286 = por %p284, %p285
      %p287 = scmp.ne.s32.totalorder %s278, %s279
      %p288 = scmp.eq.s32.totalorder %s37, 0
      %p289 = por %p287, %p288
      %p290 = scmp.ne.s32.totalorder %s278, %s279
      %p291 = scmp.eq.s32.totalorder %s38, 1
      %p292 = por %p290, %p291
      %p294 = scmp.ne.s32.totalorder %s279, %s293
      %p295 = scmp.eq.s32.totalorder %s38, 0
      %p296 = por %p294, %p295
      %s298 = sadd.s32 %s297, 1
      %p301 = scmp.eq.s32.totalorder %s32, 1
      %p302 = scmp.ne.s32.totalorder %s297, %s299
      %p303 = scmp.eq.s32.totalorder %s32, 0
      %p304 = por %p302, %p303
      %p305 = scmp.ne.s32.totalorder %s297, %s299
      %p306 = scmp.eq.s32.totalorder %s37, 1
      %p307 = por %p305, %p306
      %p308 = scmp.ne.s32.totalorder %s299, %s300
      %p309 = scmp.eq.s32.totalorder %s37, 0
      %p310 = por %p308, %p309
      %p311 = scmp.ne.s32.totalorder %s299, %s300
      %p312 = scmp.eq.s32.totalorder %s38, 1
      %p313 = por %p311, %p312
      %p315 = scmp.ne.s32.totalorder %s300, %s314
      %p316 = scmp.eq.s32.totalorder %s38, 0
      %p317 = por %p315, %p316
      %s319 = sadd.s32 %s318, 1
      %p322 = scmp.eq.s32.totalorder %s32, 1
      %p323 = scmp.ne.s32.totalorder %s318, %s320
      %p324 = scmp.eq.s32.totalorder %s32, 0
      %p325 = por %p323, %p324
      %p326 = scmp.ne.s32.totalorder %s318, %s320
      %p327 = scmp.eq.s32.totalorder %s37, 1
      %p328 = por %p326, %p327
      %p329 = scmp.ne.s32.totalorder %s320, %s321
      %p330 = scmp.eq.s32.totalorder %s37, 0
      %p331 = por %p329, %p330
      %p332 = scmp.ne.s32.totalorder %s320, %s321
      %p333 = scmp.eq.s32.totalorder %s38, 1
      %p334 = por %p332, %p333
      %p336 = scmp.ne.s32.totalorder %s321, %s335
      %p337 = scmp.eq.s32.totalorder %s38, 0
      %p338 = por %p336, %p337
      %s340 = sadd.s32 %s339, 1
      %p343 = scmp.eq.s32.totalorder %s32, 1
      %p344 = scmp.ne.s32.totalorder %s339, %s341
      %p345 = scmp.eq.s32.totalorder %s32, 0
      %p346 = por %p344, %p345
      %p347 = scmp.ne.s32.totalorder %s339, %s341
      %p348 = scmp.eq.s32.totalorder %s37, 1
      %p349 = por %p347, %p348
      %p350 = scmp.ne.s32.totalorder %s341, %s342
      %p351 = scmp.eq.s32.totalorder %s37, 0
      %p352 = por %p350, %p351
      %p353 = scmp.ne.s32.totalorder %s341, %s342
      %p354 = scmp.eq.s32.totalorder %s38, 1
      %p355 = por %p353, %p354
      %p357 = scmp.ne.s32.totalorder %s342, %s356
      %p358 = scmp.eq.s32.totalorder %s38, 0
      %p359 = por %p357, %p358
      %s361 = sadd.s32 %s360, 1
      %p364 = scmp.eq.s32.totalorder %s32, 1
      %p365 = scmp.ne.s32.totalorder %s360, %s362
      %p366 = scmp.eq.s32.totalorder %s32, 0
      %p367 = por %p365, %p366
      %p368 = scmp.ne.s32.totalorder %s360, %s362
      %p369 = scmp.eq.s32.totalorder %s37, 1
      %p370 = por %p368, %p369
      %p371 = scmp.ne.s32.totalorder %s362, %s363
      %p372 = scmp.eq.s32.totalorder %s37, 0
      %p373 = por %p371, %p372
      %p374 = scmp.ne.s32.totalorder %s362, %s363
      %p375 = scmp.eq.s32.totalorder %s38, 1
      %p376 = por %p374, %p375
      %p378 = scmp.ne.s32.totalorder %s363, %s377
      %p379 = scmp.eq.s32.totalorder %s38, 0
      %p380 = por %p378, %p379
      %s382 = sadd.s32 %s381, 1
      %p385 = scmp.eq.s32.totalorder %s32, 1
      %p386 = scmp.ne.s32.totalorder %s381, %s383
      %p387 = scmp.eq.s32.totalorder %s32, 0
      %p388 = por %p386, %p387
      %p389 = scmp.ne.s32.totalorder %s381, %s383
      %p390 = scmp.eq.s32.totalorder %s37, 1
      %p391 = por %p389, %p390
      %p392 = scmp.ne.s32.totalorder %s383, %s384
      %p393 = scmp.eq.s32.totalorder %s37, 0
      %p394 = por %p392, %p393
      %p395 = scmp.ne.s32.totalorder %s383, %s384
      %p396 = scmp.eq.s32.totalorder %s38, 1
      %p397 = por %p395, %p396
      %p399 = scmp.ne.s32.totalorder %s384, %s398
      %p400 = scmp.eq.s32.totalorder %s38, 0
      %p401 = por %p399, %p400
      %s403 = sadd.s32 %s402, 1
      %p406 = scmp.eq.s32.totalorder %s32, 1
      %p407 = scmp.ne.s32.totalorder %s402, %s404
      %p408 = scmp.eq.s32.totalorder %s32, 0
      %p409 = por %p407, %p408
      %p410 = scmp.ne.s32.totalorder %s402, %s404
      %p411 = scmp.eq.s32.totalorder %s37, 1
      %p412 = por %p410, %p411
      %p413 = scmp.ne.s32.totalorder %s404, %s405
      %p414 = scmp.eq.s32.totalorder %s37, 0
      %p415 = por %p413, %p414
      %p416 = scmp.ne.s32.totalorder %s404, %s405
      %p417 = scmp.eq.s32.totalorder %s38, 1
      %p418 = por %p416, %p417
      %p420 = scmp.ne.s32.totalorder %s405, %s419
      %p421 = scmp.eq.s32.totalorder %s38, 0
      %p422 = por %p420, %p421
      %s424 = sadd.s32 %s423, 1
      %p427 = scmp.eq.s32.totalorder %s32, 1
      %p428 = scmp.ne.s32.totalorder %s423, %s425
      %p429 = scmp.eq.s32.totalorder %s32, 0
      %p430 = por %p428, %p429
      %p431 = scmp.ne.s32.totalorder %s423, %s425
      %p432 = scmp.eq.s32.totalorder %s37, 1
      %p433 = por %p431, %p432
      %p434 = scmp.ne.s32.totalorder %s425, %s426
      %p435 = scmp.eq.s32.totalorder %s37, 0
      %p436 = por %p434, %p435
      %p437 = scmp.ne.s32.totalorder %s425, %s426
      %p438 = scmp.eq.s32.totalorder %s38, 1
      %p439 = por %p437, %p438
      %p441 = scmp.ne.s32.totalorder %s426, %s440
      %p442 = scmp.eq.s32.totalorder %s38, 0
      %p443 = por %p441, %p442
      %s444 = ssub.s32 %s32, %s39
      %p445 = scmp.eq.s32.totalorder %s444, 0
      %s447 = sadd.s32 %s446, 1
      %s448 = scalar_select %p445, %s446, %s447
      %p451 = pneg %p445
      %p452 = scmp.eq.s32.totalorder %s32, 1
      %p453 = por %p451, %p452
      %p454 = scmp.ne.s32.totalorder %s446, %s449
      %p455 = scmp.eq.s32.totalorder %s32, 0
      %p456 = por %p454, %p455
      %p457 = scmp.ne.s32.totalorder %s446, %s449
      %p458 = scmp.eq.s32.totalorder %s37, 1
      %p459 = por %p457, %p458
      %p460 = scmp.ne.s32.totalorder %s449, %s450
      %p461 = scmp.eq.s32.totalorder %s37, 0
      %p462 = por %p460, %p461
      %p463 = scmp.ne.s32.totalorder %s449, %s450
      %p464 = scmp.eq.s32.totalorder %s38, 1
      %p465 = por %p463, %p464
      %p467 = scmp.ne.s32.totalorder %s450, %s466
      %p468 = scmp.eq.s32.totalorder %s38, 0
      %p469 = por %p467, %p468
      %p470 = scmp.le.s32.totalorder 1, %s32
      %p471 = scmp.lt.s32.totalorder %s32, 3
      %p472 = pnand %p470, %p471
      %p473 = pneg %p472
      // Predicated region
      $region9: #{tpu_custom_call.1} parent=5 // pred_check
        _
      $region10: #{tpu_custom_call.1} parent=5 // pred_check_branch
        %475 = sbr.rel (%p472) target = $region12
      $region11: #{tpu_custom_call.1} parent=5 // pred_region
        %s476 = ssub.s32 %s32, 1
        // Predicated region
        $region13: #{tpu_custom_call.1} parent=11 // pred_check
          %p477 = pneg %p79
        $region14: #{tpu_custom_call.1} parent=11 // pred_check_branch
          %479 = sbr.rel (%p477) target = $region16
        $region15: #{tpu_custom_call.1} parent=11 // pred_region
          _
        $region16: #{tpu_custom_call.1} parent=11 // pred_fallthru
          _
        // Predicated region
        $region17: #{tpu_custom_call.1} parent=11 // pred_check
          %p480 = pneg %p100
        $region18: #{tpu_custom_call.1} parent=11 // pred_check_branch
          %482 = sbr.rel (%p480) target = $region20
        $region19: #{tpu_custom_call.1} parent=11 // pred_region
          _
        $region20: #{tpu_custom_call.1} parent=11 // pred_fallthru
          _
        // Predicated region
        $region21: #{tpu_custom_call.1} parent=11 // pred_check
          %p483 = pneg %p121
        $region22: #{tpu_custom_call.1} parent=11 // pred_check_branch
          %485 = sbr.rel (%p483) target = $region24
        $region23: #{tpu_custom_call.1} parent=11 // pred_region
          _
        $region24: #{tpu_custom_call.1} parent=11 // pred_fallthru
          _
        // Predicated region
        $region25: #{tpu_custom_call.1} parent=11 // pred_check
          %p486 = pneg %p142
        $region26: #{tpu_custom_call.1} parent=11 // pred_check_branch
          %488 = sbr.rel (%p486) target = $region28
        $region27: #{tpu_custom_call.1} parent=11 // pred_region
          _
        $region28: #{tpu_custom_call.1} parent=11 // pred_fallthru
          _
        // Predicated region
        $region29: #{tpu_custom_call.1} parent=11 // pred_check
          %p489 = pneg %p163
        $region30: #{tpu_custom_call.1} parent=11 // pred_check_branch
          %491 = sbr.rel (%p489) target = $region32
        $region31: #{tpu_custom_call.1} parent=11 // pred_region
          _
        $region32: #{tpu_custom_call.1} parent=11 // pred_fallthru
          _
        // Predicated region
        $region33: #{tpu_custom_call.1} parent=11 // pred_check
          %p492 = pneg %p184
        $region34: #{tpu_custom_call.1} parent=11 // pred_check_branch
          %494 = sbr.rel (%p492) target = $region36
        $region35: #{tpu_custom_call.1} parent=11 // pred_region
          _
        $region36: #{tpu_custom_call.1} parent=11 // pred_fallthru
          _
        // Predicated region
        $region37: #{tpu_custom_call.1} parent=11 // pred_check
          %p495 = pneg %p205
        $region38: #{tpu_custom_call.1} parent=11 // pred_check_branch
          %497 = sbr.rel (%p495) target = $region40
        $region39: #{tpu_custom_call.1} parent=11 // pred_region
          _
        $region40: #{tpu_custom_call.1} parent=11 // pred_fallthru
          _
        // Predicated region
        $region41: #{tpu_custom_call.1} parent=11 // pred_check
          %p498 = pneg %p226
        $region42: #{tpu_custom_call.1} parent=11 // pred_check_branch
          %500 = sbr.rel (%p498) target = $region44
        $region43: #{tpu_custom_call.1} parent=11 // pred_region
          _
        $region44: #{tpu_custom_call.1} parent=11 // pred_fallthru
          _
        // Predicated region
        $region45: #{tpu_custom_call.1} parent=11 // pred_check
          %p501 = pneg %p247
        $region46: #{tpu_custom_call.1} parent=11 // pred_check_branch
          %503 = sbr.rel (%p501) target = $region48
        $region47: #{tpu_custom_call.1} parent=11 // pred_region
          _
        $region48: #{tpu_custom_call.1} parent=11 // pred_fallthru
          _
        // Predicated region
        $region49: #{tpu_custom_call.1} parent=11 // pred_check
          %p504 = pneg %p268
        $region50: #{tpu_custom_call.1} parent=11 // pred_check_branch
          %506 = sbr.rel (%p504) target = $region52
        $region51: #{tpu_custom_call.1} parent=11 // pred_region
          _
        $region52: #{tpu_custom_call.1} parent=11 // pred_fallthru
          _
        // Predicated region
        $region53: #{tpu_custom_call.1} parent=11 // pred_check
          %p507 = pneg %p289
        $region54: #{tpu_custom_call.1} parent=11 // pred_check_branch
          %509 = sbr.rel (%p507) target = $region56
        $region55: #{tpu_custom_call.1} parent=11 // pred_region
          _
        $region56: #{tpu_custom_call.1} parent=11 // pred_fallthru
          _
        // Predicated region
        $region57: #{tpu_custom_call.1} parent=11 // pred_check
          %p510 = pneg %p310
        $region58: #{tpu_custom_call.1} parent=11 // pred_check_branch
          %512 = sbr.rel (%p510) target = $region60
        $region59: #{tpu_custom_call.1} parent=11 // pred_region
          _
        $region60: #{tpu_custom_call.1} parent=11 // pred_fallthru
          _
        // Predicated region
        $region61: #{tpu_custom_call.1} parent=11 // pred_check
          %p513 = pneg %p331
        $region62: #{tpu_custom_call.1} parent=11 // pred_check_branch
          %515 = sbr.rel (%p513) target = $region64
        $region63: #{tpu_custom_call.1} parent=11 // pred_region
          %517 = vsyncadd [#allocation4], 0
          %s518 = sshll.u32 %s13, 4
          %s519 = int_to_ptr.hbm [resolvable:$true] %s518
          %s520 = sshll.u32 [#allocation3], 4
          %s521 = int_to_ptr.vmem [resolvable:$true] %s520
          %526 = dma.hbm_to_vmem [thread:$0]  %s519, 2048, %s521, [#allocation4], 64, 64, 4
        $region64: #{tpu_custom_call.1} parent=11 // pred_fallthru
          _
        // Predicated region
        $region65: #{tpu_custom_call.1} parent=11 // pred_check
          %p527 = pneg %p352
        $region66: #{tpu_custom_call.1} parent=11 // pred_check_branch
          %529 = sbr.rel (%p527) target = $region68
        $region67: #{tpu_custom_call.1} parent=11 // pred_region
          _
        $region68: #{tpu_custom_call.1} parent=11 // pred_fallthru
          _
        // Predicated region
        $region69: #{tpu_custom_call.1} parent=11 // pred_check
          %p530 = pneg %p373
        $region70: #{tpu_custom_call.1} parent=11 // pred_check_branch
          %532 = sbr.rel (%p530) target = $region72
        $region71: #{tpu_custom_call.1} parent=11 // pred_region
          _
        $region72: #{tpu_custom_call.1} parent=11 // pred_fallthru
          _
        // Predicated region
        $region73: #{tpu_custom_call.1} parent=11 // pred_check
          %p533 = pneg %p394
        $region74: #{tpu_custom_call.1} parent=11 // pred_check_branch
          %535 = sbr.rel (%p533) target = $region76
        $region75: #{tpu_custom_call.1} parent=11 // pred_region
          _
        $region76: #{tpu_custom_call.1} parent=11 // pred_fallthru
          _
        // Predicated region
        $region77: #{tpu_custom_call.1} parent=11 // pred_check
          %p536 = pneg %p415
        $region78: #{tpu_custom_call.1} parent=11 // pred_check_branch
          %538 = sbr.rel (%p536) target = $region80
        $region79: #{tpu_custom_call.1} parent=11 // pred_region
          %540 = vsyncadd [#allocation7], 0
          %s541 = sshll.u32 %s17, 4
          %s542 = int_to_ptr.hbm [resolvable:$true] %s541
          %s543 = sshll.u32 [#allocation6], 4
          %s544 = int_to_ptr.vmem [resolvable:$true] %s543
          %549 = dma.hbm_to_vmem [thread:$0]  %s542, 2048, %s544, [#allocation7], 128, 128, 8
        $region80: #{tpu_custom_call.1} parent=11 // pred_fallthru
          _
        // Predicated region
        $region81: #{tpu_custom_call.1} parent=11 // pred_check
          %p550 = pneg %p436
        $region82: #{tpu_custom_call.1} parent=11 // pred_check_branch
          %552 = sbr.rel (%p550) target = $region84
        $region83: #{tpu_custom_call.1} parent=11 // pred_region
          %554 = vsyncadd [#allocation7], 0
          %s555 = sshll.u32 %s18, 4
          %s556 = int_to_ptr.hbm [resolvable:$true] %s555
          %s557 = sshll.u32 [#allocation8], 4
          %s558 = int_to_ptr.vmem [resolvable:$true] %s557
          %563 = dma.hbm_to_vmem [thread:$0]  %s556, 2048, %s558, [#allocation7], 128, 128, 8
        $region84: #{tpu_custom_call.1} parent=11 // pred_fallthru
          _
      $region12: #{tpu_custom_call.1} parent=5 // pred_fallthru
        _
      %p564 = scmp.lt.s32.totalorder %s32, 2
      // Predicated region
      $region85: #{tpu_custom_call.1} parent=5 // pred_check
        %p565 = pneg %p564
      $region86: #{tpu_custom_call.1} parent=5 // pred_check_branch
        %567 = sbr.rel (%p565) target = $region88
      $region87: #{tpu_custom_call.1} parent=5 // pred_region
        // Predicated region
        $region89: #{tpu_custom_call.1} parent=87 // pred_check
          %p568 = pneg %p52
        $region90: #{tpu_custom_call.1} parent=87 // pred_check_branch
          %570 = sbr.rel (%p568) target = $region92
        $region91: #{tpu_custom_call.1} parent=87 // pred_region
          %s571 = smul.u32 2, %s32
          %p572 = scmp.lt.s32.totalorder %s571, 3
          %s573 = scalar_select %p572, %s571, 3
          %s574 = scalar_lea.vmem %s0, %s573
          %s575 = smul.u32 2, %s32
        $region92: #{tpu_custom_call.1} parent=87 // pred_fallthru
          _
      $region88: #{tpu_custom_call.1} parent=5 // pred_fallthru
        _
      %p576 = scmp.le.s32.totalorder 1, %s32
      %p577 = scmp.lt.s32.totalorder %s32, 3
      %p578 = pnand %p576, %p577
      %p579 = pneg %p578
      // Predicated region
      $region93: #{tpu_custom_call.1} parent=5 // pred_check
        _
      $region94: #{tpu_custom_call.1} parent=5 // pred_check_branch
        %581 = sbr.rel (%p578) target = $region96
      $region95: #{tpu_custom_call.1} parent=5 // pred_region
        %s582 = ssub.s32 %s32, 1
        // Predicated region
        $region97: #{tpu_custom_call.1} parent=95 // pred_check
          %p583 = pneg %p331
        $region98: #{tpu_custom_call.1} parent=95 // pred_check_branch
          %585 = sbr.rel (%p583) target = $region100
        $region99: #{tpu_custom_call.1} parent=95 // pred_region
          %587 = dma.done [#allocation4], 2048
        $region100: #{tpu_custom_call.1} parent=95 // pred_fallthru
          _
        // Predicated region
        $region101: #{tpu_custom_call.1} parent=95 // pred_check
          %p588 = pneg %p415
        $region102: #{tpu_custom_call.1} parent=95 // pred_check_branch
          %590 = sbr.rel (%p588) target = $region104
        $region103: #{tpu_custom_call.1} parent=95 // pred_region
          %592 = dma.done [#allocation7], 2048
        $region104: #{tpu_custom_call.1} parent=95 // pred_fallthru
          _
        // Predicated region
        $region105: #{tpu_custom_call.1} parent=95 // pred_check
          %p593 = pneg %p436
        $region106: #{tpu_custom_call.1} parent=95 // pred_check_branch
          %595 = sbr.rel (%p593) target = $region108
        $region107: #{tpu_custom_call.1} parent=95 // pred_region
          %597 = dma.done [#allocation7], 2048
        $region108: #{tpu_custom_call.1} parent=95 // pred_fallthru
          _
        %s598 = smul.u32 2, %s37
        %p599 = scmp.lt.s32.totalorder %s598, 3
        %s600 = scalar_select %p599, %s598, 3
        %s601 = scalar_lea.vmem %s0, %s600
        %p602 = pneg %p58
        %p603 = pneg %p55
        %p604 = pneg %p79
        %p605 = pneg %p76
        %p606 = pneg %p100
        %p607 = pneg %p97
        %p608 = pneg %p121
        %p609 = pneg %p118
        %p610 = pneg %p142
        %p611 = pneg %p139
        %p612 = pneg %p163
        %p613 = pneg %p160
        %p614 = pneg %p184
        %p615 = pneg %p181
        %p616 = pneg %p205
        %p617 = pneg %p202
        %p618 = pneg %p226
        %p619 = pneg %p223
        %p620 = pneg %p247
        %p621 = pneg %p244
        %p622 = pneg %p268
        %p623 = pneg %p265
        %p624 = pneg %p289
        %p625 = pneg %p286
        %p626 = pneg %p310
        %p627 = pneg %p307
        %p628 = pneg %p331
        %p629 = pneg %p328
        %p630 = pneg %p352
        %p631 = pneg %p349
        %p632 = pneg %p373
        %p633 = pneg %p370
        %p634 = pneg %p394
        %p635 = pneg %p391
        %p636 = pneg %p415
        %p637 = pneg %p412
        %p638 = pneg %p436
        %p639 = pneg %p433
        %p640 = pneg %p462
        %p641 = pneg %p459
        %s642 = sand.u32 %s449, 1
        %s643 = scalar_lea.sflag [#allocation5], %s642
        %s644 = sand.u32 %s449, 1
        %s645 = smul.addr %s644, 2
        %s646 = scalar_lea.vmem [#allocation9], %s645
        %s647 = smul.u32 2, %s37
        %p648 = scmp.lt.s32.totalorder %s647, 3
        %s649 = scalar_select %p648, %s647, 3
        %s650 = scalar_lea.vmem %s0, %s649
        %s651 = smul.u32 2, %s37
        %s652 = smul.u32 2, %s37
        %v654 = vld [vmem:[%s650] sm:$0x3]
        %v655 = vld [vmem:[%s1] sm:$0xf]
        %v656 = vld [vmem:[%s1 + $0x4] sm:$0xf]
        %v657 = vld [vmem:[%s1 + $0x8] sm:$0xf]
        %v658 = vld [vmem:[%s1 + $0xc] sm:$0xf]
        %v659 = vld [vmem:[%s1 + $0x10] sm:$0xf]
        %v660 = vld [vmem:[%s1 + $0x14] sm:$0xf]
        %v662 = vperm.slane %v654, 0
        %v663 = vperm.slane %v654, 1
        %v666 = vpack.c.bf16 %v662, %v662
        %v667 = vpack.c.bf16 %v663, %v663
        %v674 = vunpack.c.l.b16 %v655
        %v675 = vunpack.c.l.b16 %v656
        %v676 = vunpack.c.l.b16 %v657
        %v677 = vunpack.c.l.b16 %v658
        %v678 = vunpack.c.l.b16 %v659
        %v679 = vunpack.c.l.b16 %v660
        %v680 = vpack.c.b16 %v675, %v674
        %v681 = vpack.c.b16 %v677, %v676
        %v682 = vpack.c.b16 %v679, %v678
        %vm683 = vcmask 7168
        %v685 = vsel %vm683, %v680, 0
        %v688 = vsel %vm683, %v681, 0
        %v691 = vsel %vm683, %v682, 0
        %vm693 = vcmask 1040384
        %v694 = vsel 0, 4294967295, 65535
        %v695 = vsel %vm693, %v694, 0
        %v697 = vand.u32 %v666, %v695
        %v700 = vand.u32 %v667, %v695
        %702 = vmatpush.bf16.msra.mxu0 0
        %703 = vmatpush.bf16.msra.mxu0 0
        %704 = vmatpush.bf16.msra.mxu0 0
        %705 = vmatpush.bf16.msra.mxu0 0
        %706 = vmatpush.bf16.msra.mxu0 0
        %707 = vmatpush.bf16.msra.mxu0 0
        %708 = vmatpush.bf16.msra.mxu0 0
        %709 = vmatpush.bf16.msra.mxu0 %v697
        %710 = vmatmul.bf16.gmra.mxu0 %v685
        %v711 = vpop.f32.mrf.mxu0
        %v712 = vadd.f32 0.0, %v711
        %v713 = vpop.f32.mrf.mxu0
        %v714 = vadd.f32 0.0, %v713
        %715 = vmatmul.bf16.gmra.mxu0 %v688
        %v716 = vpop.f32.mrf.mxu0
        %v717 = vadd.f32 0.0, %v716
        %v718 = vpop.f32.mrf.mxu0
        %v719 = vadd.f32 0.0, %v718
        %720 = vmatmul.bf16.gmra.mxu0 %v691
        %v721 = vpop.f32.mrf.mxu0
        %v722 = vadd.f32 0.0, %v721
        %v723 = vpop.f32.mrf.mxu0
        %v724 = vadd.f32 0.0, %v723
        %725 = vdwg.mxu0
        %726 = vmatpush.bf16.msra.mxu0 0
        %727 = vmatpush.bf16.msra.mxu0 0
        %728 = vmatpush.bf16.msra.mxu0 0
        %729 = vmatpush.bf16.msra.mxu0 0
        %730 = vmatpush.bf16.msra.mxu0 0
        %731 = vmatpush.bf16.msra.mxu0 0
        %732 = vmatpush.bf16.msra.mxu0 0
        %733 = vmatpush.bf16.msra.mxu0 %v700
        %734 = vmatmul.bf16.gmra.mxu0 %v685
        %v735 = vpop.f32.mrf.mxu0
        %v736 = vadd.f32 0.0, %v735
        %v737 = vpop.f32.mrf.mxu0
        %v738 = vadd.f32 0.0, %v737
        %739 = vmatmul.bf16.gmra.mxu0 %v688
        %v740 = vpop.f32.mrf.mxu0
        %v741 = vadd.f32 0.0, %v740
        %v742 = vpop.f32.mrf.mxu0
        %v743 = vadd.f32 0.0, %v742
        %744 = vmatmul.bf16.gmra.mxu0 %v691
        %v745 = vpop.f32.mrf.mxu0
        %v746 = vadd.f32 0.0, %v745
        %v747 = vpop.f32.mrf.mxu0
        %v748 = vadd.f32 0.0, %v747
        %749 = vdwg.mxu0
        %750 = vrot.lane.b32.xlu0 %v712, 1
        %v751 = vpop.permute.xlu0 %750
        %752 = vrot.lane.b32.xlu0 %v714, 1
        %v753 = vpop.permute.xlu0 %752
        %754 = vrot.lane.b32.xlu0 %v736, 1
        %v755 = vpop.permute.xlu0 %754
        %756 = vrot.lane.b32.xlu0 %v738, 1
        %v757 = vpop.permute.xlu0 %756
        %v758 = vlaneseq
        %v759 = vand.u32 %v758, 127
        %vm760 = vcmp.lt.s32.totalorder %v759, 1
        %v761 = vsel %vm760, %v751, %v755
        %v762 = vsel %vm760, %v753, %v757
        %v763 = vsel %vm760, %v755, %v751
        %v764 = vsel %vm760, %v757, %v753
        %v765 = vld [vmem:[%s9] sm:$0x3]
        %v767 = vperm.slane %v765, 0
        %v768 = vperm.slane %v765, 1
        %v771 = vmul.f32 %v763, %v767
        %v772 = vmul.f32 %v761, %v768
        %v773 = vmul.f32 %v764, %v767
        %v774 = vmul.f32 %v762, %v768
        %v775 = vadd.f32 %v771, %v717
        %v776 = vadd.f32 %v772, %v741
        %v777 = vadd.f32 %v773, %v719
        %v778 = vadd.f32 %v774, %v743
        %779 = vrot.lane.b32.xlu0 %v722, 127
        %v780 = vpop.permute.xlu0 %779
        %781 = vrot.lane.b32.xlu0 %v724, 127
        %v782 = vpop.permute.xlu0 %781
        %783 = vrot.lane.b32.xlu0 %v746, 127
        %v784 = vpop.permute.xlu0 %783
        %785 = vrot.lane.b32.xlu0 %v748, 127
        %v786 = vpop.permute.xlu0 %785
        %vm787 = vcmp.lt.s32.totalorder %v759, 127
        %v788 = vsel %vm787, %v780, %v784
        %v789 = vsel %vm787, %v782, %v786
        %v790 = vsel %vm787, %v784, %v780
        %v791 = vsel %vm787, %v786, %v782
        %v792 = vld [vmem:[%s10] sm:$0x3]
        %v794 = vperm.slane %v792, 0
        %v795 = vperm.slane %v792, 1
        %v798 = vmul.f32 %v788, %v794
        %v799 = vmul.f32 %v790, %v795
        %v800 = vmul.f32 %v789, %v794
        %v801 = vmul.f32 %v791, %v795
        %v802 = vadd.f32 %v775, %v798
        %v803 = vadd.f32 %v776, %v799
        %v804 = vadd.f32 %v777, %v800
        %v805 = vadd.f32 %v778, %v801
        %v806 = vld [vmem:[%s2] sm:$0xff]
        %v807 = vld [vmem:[%s2 + $0x8] sm:$0xff]
        %809 = vset.pattern.permute.xlu0 0
        %810 = vperm.xlu0 %809, %v806
        %v811 = vpop.permute.xlu0 %810
        %814 = vset.pattern.permute.xlu0 0
        %815 = vperm.xlu0 %814, %v807
        %v816 = vpop.permute.xlu0 %815
        %v818 = vadd.f32 %v802, %v811
        %v819 = vadd.f32 %v803, %v811
        %v820 = vadd.f32 %v804, %v816
        %v821 = vadd.f32 %v805, %v816
        %v822 = vmax.f32 %v818, 0.0
        %v823 = vmax.f32 %v819, 0.0
        %v824 = vmax.f32 %v820, 0.0
        %v825 = vmax.f32 %v821, 0.0
        %826 = vrot.lane.b32.xlu0 %v822, 127
        %v827 = vpop.permute.xlu0 %826
        %828 = vrot.lane.b32.xlu0 %v824, 127
        %v829 = vpop.permute.xlu0 %828
        %830 = vrot.lane.b32.xlu0 %v823, 127
        %v831 = vpop.permute.xlu0 %830
        %832 = vrot.lane.b32.xlu0 %v825, 127
        %v833 = vpop.permute.xlu0 %832
        %v834 = vsel %vm787, %v827, %v831
        %v835 = vsel %vm787, %v829, %v833
        %v836 = vsel %vm787, %v831, %v827
        %v837 = vsel %vm787, %v833, %v829
        %v838 = vmax.f32 %v822, %v834
        %v839 = vmax.f32 %v823, %v836
        %v840 = vmax.f32 %v824, %v835
        %v841 = vmax.f32 %v825, %v837
        %v842 = vpack.c.bf16 %v840, %v838
        %v843 = vpack.c.bf16 %v841, %v839
        %v844 = vld [vmem:[#allocation3] sm:$0xf]
        %v845 = vld [vmem:[#allocation3 + $0x4] sm:$0xf]
        %v846 = vld [vmem:[#allocation3 + $0x8] sm:$0xf]
        %v847 = vld [vmem:[#allocation3 + $0xc] sm:$0xf]
        %v848 = vld [vmem:[#allocation3 + $0x10] sm:$0xf]
        %v849 = vld [vmem:[#allocation3 + $0x14] sm:$0xf]
        %v850 = vld [vmem:[#allocation3 + $0x18] sm:$0xf]
        %v851 = vld [vmem:[#allocation3 + $0x1c] sm:$0xf]
        %v852 = vld [vmem:[#allocation3 + $0x20] sm:$0xf]
        %v853 = vld [vmem:[#allocation3 + $0x24] sm:$0xf]
        %v854 = vld [vmem:[#allocation3 + $0x28] sm:$0xf]
        %v855 = vld [vmem:[#allocation3 + $0x2c] sm:$0xf]
        %v856 = vld [vmem:[#allocation3 + $0x30] sm:$0xf]
        %v857 = vld [vmem:[#allocation3 + $0x34] sm:$0xf]
        %v858 = vld [vmem:[#allocation3 + $0x38] sm:$0xf]
        %v859 = vld [vmem:[#allocation3 + $0x3c] sm:$0xf]
        %v860 = vld [vmem:[#allocation3 + $0x40] sm:$0xf]
        %v861 = vld [vmem:[#allocation3 + $0x44] sm:$0xf]
        %v862 = vld [vmem:[#allocation3 + $0x48] sm:$0xf]
        %v863 = vld [vmem:[#allocation3 + $0x4c] sm:$0xf]
        %v864 = vld [vmem:[#allocation3 + $0x50] sm:$0xf]
        %v865 = vld [vmem:[#allocation3 + $0x54] sm:$0xf]
        %v866 = vld [vmem:[#allocation3 + $0x58] sm:$0xf]
        %v867 = vld [vmem:[#allocation3 + $0x5c] sm:$0xf]
        %v868 = vld [vmem:[#allocation3 + $0x60] sm:$0xf]
        %v869 = vld [vmem:[#allocation3 + $0x64] sm:$0xf]
        %v870 = vld [vmem:[#allocation3 + $0x68] sm:$0xf]
        %v871 = vld [vmem:[#allocation3 + $0x6c] sm:$0xf]
        %v872 = vld [vmem:[#allocation3 + $0x70] sm:$0xf]
        %v873 = vld [vmem:[#allocation3 + $0x74] sm:$0xf]
        %v874 = vld [vmem:[#allocation3 + $0x78] sm:$0xf]
        %v875 = vld [vmem:[#allocation3 + $0x7c] sm:$0xf]
        %v908 = vunpack.c.l.b16 %v844
        %v909 = vunpack.c.l.b16 %v845
        %v910 = vunpack.c.l.b16 %v846
        %v911 = vunpack.c.l.b16 %v847
        %v912 = vunpack.c.l.b16 %v848
        %v913 = vunpack.c.l.b16 %v849
        %v914 = vunpack.c.l.b16 %v850
        %v915 = vunpack.c.l.b16 %v851
        %v916 = vunpack.c.l.b16 %v852
        %v917 = vunpack.c.l.b16 %v853
        %v918 = vunpack.c.l.b16 %v854
        %v919 = vunpack.c.l.b16 %v855
        %v920 = vunpack.c.l.b16 %v856
        %v921 = vunpack.c.l.b16 %v857
        %v922 = vunpack.c.l.b16 %v858
        %v923 = vunpack.c.l.b16 %v859
        %v924 = vunpack.c.l.b16 %v860
        %v925 = vunpack.c.l.b16 %v861
        %v926 = vunpack.c.l.b16 %v862
        %v927 = vunpack.c.l.b16 %v863
        %v928 = vunpack.c.l.b16 %v864
        %v929 = vunpack.c.l.b16 %v865
        %v930 = vunpack.c.l.b16 %v866
        %v931 = vunpack.c.l.b16 %v867
        %v932 = vunpack.c.l.b16 %v868
        %v933 = vunpack.c.l.b16 %v869
        %v934 = vunpack.c.l.b16 %v870
        %v935 = vunpack.c.l.b16 %v871
        %v936 = vunpack.c.l.b16 %v872
        %v937 = vunpack.c.l.b16 %v873
        %v938 = vunpack.c.l.b16 %v874
        %v939 = vunpack.c.l.b16 %v875
        %v940 = vpack.c.b16 %v909, %v908
        %v941 = vpack.c.b16 %v911, %v910
        %v942 = vpack.c.b16 %v913, %v912
        %v943 = vpack.c.b16 %v915, %v914
        %v944 = vpack.c.b16 %v917, %v916
        %v945 = vpack.c.b16 %v919, %v918
        %v946 = vpack.c.b16 %v921, %v920
        %v947 = vpack.c.b16 %v923, %v922
        %v948 = vpack.c.b16 %v925, %v924
        %v949 = vpack.c.b16 %v927, %v926
        %v950 = vpack.c.b16 %v929, %v928
        %v951 = vpack.c.b16 %v931, %v930
        %v952 = vpack.c.b16 %v933, %v932
        %v953 = vpack.c.b16 %v935, %v934
        %v954 = vpack.c.b16 %v937, %v936
        %v955 = vpack.c.b16 %v939, %v938
        %972 = vmatpush.bf16.msra.mxu0 %v947
        %973 = vmatpush.bf16.msra.mxu0 %v946
        %974 = vmatpush.bf16.msra.mxu0 %v945
        %975 = vmatpush.bf16.msra.mxu0 %v944
        %976 = vmatpush.bf16.msra.mxu0 %v943
        %977 = vmatpush.bf16.msra.mxu0 %v942
        %978 = vmatpush.bf16.msra.mxu0 %v941
        %979 = vmatpush.bf16.msra.mxu0 %v940
        %980 = vmatmul.bf16.gmra.mxu0 %v842
        %v981 = vpop.f32.mrf.mxu0
        %v982 = vadd.f32 0.0, %v981
        %v983 = vpop.f32.mrf.mxu0
        %v984 = vadd.f32 0.0, %v983
        %985 = vdwg.mxu0
        %986 = vmatpush.bf16.msra.mxu0 %v955
        %987 = vmatpush.bf16.msra.mxu0 %v954
        %988 = vmatpush.bf16.msra.mxu0 %v953
        %989 = vmatpush.bf16.msra.mxu0 %v952
        %990 = vmatpush.bf16.msra.mxu0 %v951
        %991 = vmatpush.bf16.msra.mxu0 %v950
        %992 = vmatpush.bf16.msra.mxu0 %v949
        %993 = vmatpush.bf16.msra.mxu0 %v948
        %994 = vmatmul.bf16.gmra.mxu0 %v843
        %v995 = vpop.f32.mrf.mxu0
        %v996 = vadd.f32 %v982, %v995
        %v997 = vpop.f32.mrf.mxu0
        %v998 = vadd.f32 %v984, %v997
        %999 = vdwg.mxu0
        %v1000 = vld [vmem:[%s3] sm:$0xf]
        %v1001 = vld [vmem:[%s3 + $0x4] sm:$0xf]
        %v1002 = vld [vmem:[%s3 + $0x8] sm:$0xf]
        %v1003 = vld [vmem:[%s3 + $0xc] sm:$0xf]
        %v1004 = vld [vmem:[%s3 + $0x10] sm:$0xf]
        %v1005 = vld [vmem:[%s3 + $0x14] sm:$0xf]
        %v1006 = vld [vmem:[%s3 + $0x18] sm:$0xf]
        %v1007 = vld [vmem:[%s3 + $0x1c] sm:$0xf]
        %v1008 = vld [vmem:[%s3 + $0x20] sm:$0xf]
        %v1009 = vld [vmem:[%s3 + $0x24] sm:$0xf]
        %v1010 = vld [vmem:[%s3 + $0x28] sm:$0xf]
        %v1011 = vld [vmem:[%s3 + $0x2c] sm:$0xf]
        %v1012 = vpack.c.bf16 %v998, %v996
        %v1025 = vunpack.c.l.b16 %v1000
        %v1026 = vunpack.c.l.b16 %v1001
        %v1027 = vunpack.c.l.b16 %v1002
        %v1028 = vunpack.c.l.b16 %v1003
        %v1029 = vunpack.c.l.b16 %v1004
        %v1030 = vunpack.c.l.b16 %v1005
        %v1031 = vunpack.c.l.b16 %v1006
        %v1032 = vunpack.c.l.b16 %v1007
        %v1033 = vunpack.c.l.b16 %v1008
        %v1034 = vunpack.c.l.b16 %v1009
        %v1035 = vunpack.c.l.b16 %v1010
        %v1036 = vunpack.c.l.b16 %v1011
        %v1037 = vpack.c.b16 %v1026, %v1025
        %v1038 = vpack.c.b16 %v1028, %v1027
        %v1039 = vpack.c.b16 %v1030, %v1029
        %v1040 = vpack.c.b16 %v1032, %v1031
        %v1041 = vpack.c.b16 %v1034, %v1033
        %v1042 = vpack.c.b16 %v1036, %v1035
        %vm1043 = vcmask 130048
        %v1045 = vsel %vm1043, %v1037, 0
        %v1048 = vsel %vm1043, %v1038, 0
        %v1051 = vsel %vm1043, %v1039, 0
        %v1054 = vsel %vm1043, %v1040, 0
        %v1057 = vsel %vm1043, %v1041, 0
        %v1060 = vsel %vm1043, %v1042, 0
        %1062 = vmatpush.bf16.msra.mxu0 0
        %1063 = vmatpush.bf16.msra.mxu0 0
        %1064 = vmatpush.bf16.msra.mxu0 0
        %1065 = vmatpush.bf16.msra.mxu0 0
        %1066 = vmatpush.bf16.msra.mxu0 0
        %1067 = vmatpush.bf16.msra.mxu0 0
        %1068 = vmatpush.bf16.msra.mxu0 0
        %1069 = vmatpush.bf16.msra.mxu0 %v1012
        %1070 = vmatmul.bf16.gmra.mxu0 %v1045
        %v1071 = vpop.f32.mrf.mxu0
        %v1072 = vadd.f32 0.0, %v1071
        %v1073 = vpop.f32.mrf.mxu0
        %v1074 = vadd.f32 0.0, %v1073
        %1075 = vmatmul.bf16.gmra.mxu0 %v1048
        %v1076 = vpop.f32.mrf.mxu0
        %v1077 = vadd.f32 0.0, %v1076
        %v1078 = vpop.f32.mrf.mxu0
        %v1079 = vadd.f32 0.0, %v1078
        %1080 = vmatmul.bf16.gmra.mxu0 %v1051
        %v1081 = vpop.f32.mrf.mxu0
        %v1082 = vadd.f32 0.0, %v1081
        %v1083 = vpop.f32.mrf.mxu0
        %v1084 = vadd.f32 0.0, %v1083
        %1085 = vmatmul.bf16.gmra.mxu0 %v1054
        %v1086 = vpop.f32.mrf.mxu0
        %v1087 = vadd.f32 0.0, %v1086
        %v1088 = vpop.f32.mrf.mxu0
        %v1089 = vadd.f32 0.0, %v1088
        %1090 = vmatmul.bf16.gmra.mxu0 %v1057
        %v1091 = vpop.f32.mrf.mxu0
        %v1092 = vadd.f32 0.0, %v1091
        %v1093 = vpop.f32.mrf.mxu0
        %v1094 = vadd.f32 0.0, %v1093
        %1095 = vmatmul.bf16.gmra.mxu0 %v1060
        %v1096 = vpop.f32.mrf.mxu0
        %v1097 = vadd.f32 0.0, %v1096
        %v1098 = vpop.f32.mrf.mxu0
        %v1099 = vadd.f32 0.0, %v1098
        %1100 = vdwg.mxu0
        %1101 = vrot.lane.b32.xlu0 %v1072, 1
        %v1102 = vpop.permute.xlu0 %1101
        %1103 = vrot.lane.b32.xlu0 %v1074, 1
        %v1104 = vpop.permute.xlu0 %1103
        %1105 = vrot.lane.b32.xlu0 %v1077, 1
        %v1106 = vpop.permute.xlu0 %1105
        %1107 = vrot.lane.b32.xlu0 %v1079, 1
        %v1108 = vpop.permute.xlu0 %1107
        %v1109 = vld [vmem:[%s11] sm:$0x1]
        %v1111 = vperm.slane %v1109, 0
        %v1113 = vmul.f32 %v1102, %v1111
        %v1114 = vmul.f32 %v1104, %v1111
        %v1115 = vmul.f32 %v1106, %v1111
        %v1116 = vmul.f32 %v1108, %v1111
        %v1117 = vadd.f32 %v1113, %v1082
        %v1118 = vadd.f32 %v1114, %v1084
        %v1119 = vadd.f32 %v1115, %v1087
        %v1120 = vadd.f32 %v1116, %v1089
        %1121 = vrot.lane.b32.xlu0 %v1092, 127
        %v1122 = vpop.permute.xlu0 %1121
        %1123 = vrot.lane.b32.xlu0 %v1094, 127
        %v1124 = vpop.permute.xlu0 %1123
        %1125 = vrot.lane.b32.xlu0 %v1097, 127
        %v1126 = vpop.permute.xlu0 %1125
        %1127 = vrot.lane.b32.xlu0 %v1099, 127
        %v1128 = vpop.permute.xlu0 %1127
        %v1129 = vld [vmem:[%s12] sm:$0x1]
        %v1131 = vperm.slane %v1129, 0
        %v1133 = vmul.f32 %v1122, %v1131
        %v1134 = vmul.f32 %v1124, %v1131
        %v1135 = vmul.f32 %v1126, %v1131
        %v1136 = vmul.f32 %v1128, %v1131
        %v1137 = vadd.f32 %v1117, %v1133
        %v1138 = vadd.f32 %v1118, %v1134
        %v1139 = vadd.f32 %v1119, %v1135
        %v1140 = vadd.f32 %v1120, %v1136
        %v1141 = vld [vmem:[%s4] sm:$0xff]
        %v1142 = vld [vmem:[%s4 + $0x8] sm:$0xff]
        %v1143 = vld [vmem:[%s4 + $0x10] sm:$0xff]
        %v1144 = vld [vmem:[%s4 + $0x18] sm:$0xff]
        %1146 = vset.pattern.permute.xlu0 0
        %1147 = vperm.xlu0 %1146, %v1141
        %v1148 = vpop.permute.xlu0 %1147
        %1151 = vset.pattern.permute.xlu0 0
        %1152 = vperm.xlu0 %1151, %v1142
        %v1153 = vpop.permute.xlu0 %1152
        %1156 = vset.pattern.permute.xlu0 0
        %1157 = vperm.xlu0 %1156, %v1143
        %v1158 = vpop.permute.xlu0 %1157
        %1161 = vset.pattern.permute.xlu0 0
        %1162 = vperm.xlu0 %1161, %v1144
        %v1163 = vpop.permute.xlu0 %1162
        %v1165 = vadd.f32 %v1137, %v1148
        %v1166 = vadd.f32 %v1138, %v1153
        %v1167 = vadd.f32 %v1139, %v1158
        %v1168 = vadd.f32 %v1140, %v1163
        %v1169 = vmax.f32 %v1165, 0.0
        %v1170 = vmax.f32 %v1166, 0.0
        %v1171 = vmax.f32 %v1167, 0.0
        %v1172 = vmax.f32 %v1168, 0.0
        %1173 = vrot.lane.b32.xlu0 %v1169, 127
        %v1174 = vpop.permute.xlu0 %1173
        %1175 = vrot.lane.b32.xlu0 %v1170, 127
        %v1176 = vpop.permute.xlu0 %1175
        %1177 = vrot.lane.b32.xlu0 %v1171, 127
        %v1178 = vpop.permute.xlu0 %1177
        %1179 = vrot.lane.b32.xlu0 %v1172, 127
        %v1180 = vpop.permute.xlu0 %1179
        %v1181 = vmax.f32 %v1169, %v1174
        %v1182 = vmax.f32 %v1170, %v1176
        %v1183 = vmax.f32 %v1171, %v1178
        %v1184 = vmax.f32 %v1172, %v1180
        %v1185 = vpack.c.bf16 %v1182, %v1181
        %v1186 = vpack.c.bf16 %v1184, %v1183
        %v1187 = vld [vmem:[%s14] sm:$0xf]
        %v1188 = vld [vmem:[%s14 + $0x4] sm:$0xf]
        %v1189 = vld [vmem:[%s14 + $0x8] sm:$0xf]
        %v1190 = vld [vmem:[%s14 + $0xc] sm:$0xf]
        %v1191 = vld [vmem:[%s14 + $0x10] sm:$0xf]
        %v1192 = vld [vmem:[%s14 + $0x14] sm:$0xf]
        %v1193 = vld [vmem:[%s14 + $0x18] sm:$0xf]
        %v1194 = vld [vmem:[%s14 + $0x1c] sm:$0xf]
        %v1195 = vld [vmem:[%s14 + $0x20] sm:$0xf]
        %v1196 = vld [vmem:[%s14 + $0x24] sm:$0xf]
        %v1197 = vld [vmem:[%s14 + $0x28] sm:$0xf]
        %v1198 = vld [vmem:[%s14 + $0x2c] sm:$0xf]
        %v1199 = vld [vmem:[%s14 + $0x30] sm:$0xf]
        %v1200 = vld [vmem:[%s14 + $0x34] sm:$0xf]
        %v1201 = vld [vmem:[%s14 + $0x38] sm:$0xf]
        %v1202 = vld [vmem:[%s14 + $0x3c] sm:$0xf]
        %v1219 = vunpack.c.l.b16 %v1187
        %v1220 = vunpack.c.l.b16 %v1188
        %v1221 = vunpack.c.l.b16 %v1189
        %v1222 = vunpack.c.l.b16 %v1190
        %v1223 = vunpack.c.l.b16 %v1191
        %v1224 = vunpack.c.l.b16 %v1192
        %v1225 = vunpack.c.l.b16 %v1193
        %v1226 = vunpack.c.l.b16 %v1194
        %v1227 = vunpack.c.l.b16 %v1195
        %v1228 = vunpack.c.l.b16 %v1196
        %v1229 = vunpack.c.l.b16 %v1197
        %v1230 = vunpack.c.l.b16 %v1198
        %v1231 = vunpack.c.l.b16 %v1199
        %v1232 = vunpack.c.l.b16 %v1200
        %v1233 = vunpack.c.l.b16 %v1201
        %v1234 = vunpack.c.l.b16 %v1202
        %v1235 = vpack.c.b16 %v1220, %v1219
        %v1236 = vpack.c.b16 %v1222, %v1221
        %v1237 = vpack.c.b16 %v1224, %v1223
        %v1238 = vpack.c.b16 %v1226, %v1225
        %v1239 = vpack.c.b16 %v1228, %v1227
        %v1240 = vpack.c.b16 %v1230, %v1229
        %v1241 = vpack.c.b16 %v1232, %v1231
        %v1242 = vpack.c.b16 %v1234, %v1233
        %1251 = vmatpush.bf16.msra.mxu0 %v1242
        %1252 = vmatpush.bf16.msra.mxu0 %v1241
        %1253 = vmatpush.bf16.msra.mxu0 %v1240
        %1254 = vmatpush.bf16.msra.mxu0 %v1239
        %1255 = vmatpush.bf16.msra.mxu0 %v1238
        %1256 = vmatpush.bf16.msra.mxu0 %v1237
        %1257 = vmatpush.bf16.msra.mxu0 %v1236
        %1258 = vmatpush.bf16.msra.mxu0 %v1235
        %1259 = vmatmul.bf16.gmra.mxu0 %v1185
        %v1260 = vpop.f32.mrf.mxu0
        %v1261 = vadd.f32 0.0, %v1260
        %v1262 = vpop.f32.mrf.mxu0
        %v1263 = vadd.f32 0.0, %v1262
        %1264 = vmatmul.bf16.gmra.mxu0 %v1186
        %v1265 = vpop.f32.mrf.mxu0
        %v1266 = vadd.f32 0.0, %v1265
        %v1267 = vpop.f32.mrf.mxu0
        %v1268 = vadd.f32 0.0, %v1267
        %1269 = vdwg.mxu0
        %v1270 = vld [vmem:[%s5] sm:$0xf]
        %v1271 = vld [vmem:[%s5 + $0x4] sm:$0xf]
        %v1272 = vld [vmem:[%s5 + $0x8] sm:$0xf]
        %v1273 = vld [vmem:[%s5 + $0xc] sm:$0xf]
        %v1274 = vpack.c.bf16 %v1263, %v1261
        %v1275 = vpack.c.bf16 %v1268, %v1266
        %v1280 = vunpack.c.l.b16 %v1270
        %v1281 = vunpack.c.l.b16 %v1271
        %v1282 = vunpack.c.l.b16 %v1272
        %v1283 = vunpack.c.l.b16 %v1273
        %v1284 = vpack.c.b16 %v1281, %v1280
        %v1285 = vpack.c.b16 %v1283, %v1282
        %vm1286 = vcmask 261120
        %v1288 = vsel %vm1286, %v1284, 0
        %v1291 = vsel %vm1286, %v1285, 0
        %1293 = vmatpush.bf16.msra.mxu0 0
        %1294 = vmatpush.bf16.msra.mxu0 0
        %1295 = vmatpush.bf16.msra.mxu0 0
        %1296 = vmatpush.bf16.msra.mxu0 0
        %1297 = vmatpush.bf16.msra.mxu0 0
        %1298 = vmatpush.bf16.msra.mxu0 0
        %1299 = vmatpush.bf16.msra.mxu0 %v1275
        %1300 = vmatpush.bf16.msra.mxu0 %v1274
        %1301 = vmatmul.bf16.gmra.mxu0 %v1288
        %v1302 = vpop.f32.mrf.mxu0
        %v1303 = vadd.f32 0.0, %v1302
        %v1304 = vpop.f32.mrf.mxu0
        %v1305 = vadd.f32 0.0, %v1304
        %1306 = vmatmul.bf16.gmra.mxu0 %v1291
        %v1307 = vpop.f32.mrf.mxu0
        %v1308 = vadd.f32 0.0, %v1307
        %v1309 = vpop.f32.mrf.mxu0
        %v1310 = vadd.f32 0.0, %v1309
        %1311 = vdwg.mxu0
        %v1312 = vld [vmem:[%s6] sm:$0xff]
        %v1313 = vld [vmem:[%s6 + $0x8] sm:$0xff]
        %1315 = vset.pattern.permute.xlu0 0
        %1316 = vperm.xlu0 %1315, %v1312
        %v1317 = vpop.permute.xlu0 %1316
        %1320 = vset.pattern.permute.xlu0 0
        %1321 = vperm.xlu0 %1320, %v1313
        %v1322 = vpop.permute.xlu0 %1321
        %v1324 = vadd.f32 %v1303, %v1317
        %v1325 = vadd.f32 %v1305, %v1322
        %v1326 = vpack.c.bf16 %v1325, %v1324
        %v1327 = vadd.f32 %v1308, %v1317
        %v1328 = vadd.f32 %v1310, %v1322
        %v1329 = vpack.c.bf16 %v1328, %v1327
        %v1330 = vld [vmem:[%s15] sm:$0xf]
        %v1331 = vld [vmem:[%s15 + $0x4] sm:$0xf]
        %v1332 = vld [vmem:[%s15 + $0x8] sm:$0xf]
        %v1333 = vld [vmem:[%s15 + $0xc] sm:$0xf]
        %v1334 = vld [vmem:[%s15 + $0x10] sm:$0xf]
        %v1335 = vld [vmem:[%s15 + $0x14] sm:$0xf]
        %v1336 = vld [vmem:[%s15 + $0x18] sm:$0xf]
        %v1337 = vld [vmem:[%s15 + $0x1c] sm:$0xf]
        %v1338 = vld [vmem:[%s16] sm:$0xf]
        %v1339 = vld [vmem:[%s16 + $0x4] sm:$0xf]
        %v1340 = vld [vmem:[%s16 + $0x8] sm:$0xf]
        %v1341 = vld [vmem:[%s16 + $0xc] sm:$0xf]
        %v1342 = vld [vmem:[%s16 + $0x10] sm:$0xf]
        %v1343 = vld [vmem:[%s16 + $0x14] sm:$0xf]
        %v1344 = vld [vmem:[%s16 + $0x18] sm:$0xf]
        %v1345 = vld [vmem:[%s16 + $0x1c] sm:$0xf]
        %v1354 = vunpack.c.l.b16 %v1338
        %v1355 = vunpack.c.l.b16 %v1339
        %v1356 = vunpack.c.l.b16 %v1340
        %v1357 = vunpack.c.l.b16 %v1341
        %v1358 = vunpack.c.l.b16 %v1342
        %v1359 = vunpack.c.l.b16 %v1343
        %v1360 = vunpack.c.l.b16 %v1344
        %v1361 = vunpack.c.l.b16 %v1345
        %v1362 = vpack.c.b16 %v1355, %v1354
        %v1363 = vpack.c.b16 %v1357, %v1356
        %v1364 = vpack.c.b16 %v1359, %v1358
        %v1365 = vpack.c.b16 %v1361, %v1360
        %vm1370 = vcmask 523264
        %v1372 = vsel %vm1370, %v1329, 0
        %1374 = vmatpush.bf16.msra.mxu0 0
        %1375 = vmatpush.bf16.msra.mxu0 0
        %1376 = vmatpush.bf16.msra.mxu0 0
        %1377 = vmatpush.bf16.msra.mxu0 0
        %1378 = vmatpush.bf16.msra.mxu0 %v1365
        %1379 = vmatpush.bf16.msra.mxu0 %v1364
        %1380 = vmatpush.bf16.msra.mxu0 %v1363
        %1381 = vmatpush.bf16.msra.mxu0 %v1362
        %1382 = vmatmul.bf16.gmra.mxu0 %v1372
        %v1383 = vpop.f32.mrf.mxu0
        %v1384 = vadd.f32 0.0, %v1383
        %v1385 = vpop.f32.mrf.mxu0
        %v1386 = vadd.f32 0.0, %v1385
        %1387 = vdwg.mxu0
        %v1396 = vunpack.c.l.b16 %v1330
        %v1397 = vunpack.c.l.b16 %v1331
        %v1398 = vunpack.c.l.b16 %v1332
        %v1399 = vunpack.c.l.b16 %v1333
        %v1400 = vunpack.c.l.b16 %v1334
        %v1401 = vunpack.c.l.b16 %v1335
        %v1402 = vunpack.c.l.b16 %v1336
        %v1403 = vunpack.c.l.b16 %v1337
        %v1404 = vpack.c.b16 %v1397, %v1396
        %v1405 = vpack.c.b16 %v1399, %v1398
        %v1406 = vpack.c.b16 %v1401, %v1400
        %v1407 = vpack.c.b16 %v1403, %v1402
        %v1413 = vsel %vm1370, %v1326, 0
        %1415 = vmatpush.bf16.msra.mxu0 0
        %1416 = vmatpush.bf16.msra.mxu0 0
        %1417 = vmatpush.bf16.msra.mxu0 0
        %1418 = vmatpush.bf16.msra.mxu0 0
        %1419 = vmatpush.bf16.msra.mxu0 %v1407
        %1420 = vmatpush.bf16.msra.mxu0 %v1406
        %1421 = vmatpush.bf16.msra.mxu0 %v1405
        %1422 = vmatpush.bf16.msra.mxu0 %v1404
        %1423 = vmatmul.bf16.gmra.mxu0 %v1413
        %v1424 = vpop.f32.mrf.mxu0
        %v1425 = vadd.f32 %v1384, %v1424
        %v1426 = vpop.f32.mrf.mxu0
        %v1427 = vadd.f32 %v1386, %v1426
        %1428 = vdwg.mxu0
        %v1429 = vmax.f32 %v1425, 0.0
        %v1430 = vmax.f32 %v1427, 0.0
        %v1431 = vld [vmem:[%s7] sm:$0xf]
        %v1432 = vld [vmem:[%s7 + $0x4] sm:$0xf]
        %v1433 = vpack.c.bf16 %v1430, %v1429
        %v1436 = vunpack.c.l.b16 %v1431
        %v1437 = vunpack.c.l.b16 %v1432
        %v1438 = vpack.c.b16 %v1437, %v1436
        %v1440 = vsel %vm1043, %v1438, 0
        %1442 = vmatpush.bf16.msra.mxu0 0
        %1443 = vmatpush.bf16.msra.mxu0 0
        %1444 = vmatpush.bf16.msra.mxu0 0
        %1445 = vmatpush.bf16.msra.mxu0 0
        %1446 = vmatpush.bf16.msra.mxu0 0
        %1447 = vmatpush.bf16.msra.mxu0 0
        %1448 = vmatpush.bf16.msra.mxu0 0
        %1449 = vmatpush.bf16.msra.mxu0 %v1433
        %1450 = vmatmul.bf16.gmra.mxu0 %v1440
        %v1451 = vpop.f32.mrf.mxu0
        %v1452 = vadd.f32 0.0, %v1451
        %v1453 = vpop.f32.mrf.mxu0
        %v1454 = vadd.f32 0.0, %v1453
        %1455 = vdwg.mxu0
        %v1456 = vld [vmem:[#allocation2] sm:$0x1]
        %1458 = vset.pattern.permute.xlu0 0
        %1459 = vperm.xlu0 %1458, %v1456
        %v1460 = vpop.permute.xlu0 %1459
        %v1462 = vperm.slane %v1460, 0
        %v1463 = vadd.f32 %v1452, %v1462
        %v1464 = vpack.c.bf16 %v1463, %v1463
        %v1465 = vadd.f32 %v1454, %v1462
        %v1466 = vpack.c.bf16 %v1465, %v1465
        %v1467 = vld [vmem:[#allocation6] sm:$0xff]
        %v1468 = vld [vmem:[#allocation6 + $0x8] sm:$0xff]
        %v1469 = vld [vmem:[#allocation6 + $0x10] sm:$0xff]
        %v1470 = vld [vmem:[#allocation6 + $0x18] sm:$0xff]
        %v1471 = vld [vmem:[#allocation6 + $0x20] sm:$0xff]
        %v1472 = vld [vmem:[#allocation6 + $0x28] sm:$0xff]
        %v1473 = vld [vmem:[#allocation6 + $0x30] sm:$0xff]
        %v1474 = vld [vmem:[#allocation6 + $0x38] sm:$0xff]
        %v1475 = vld [vmem:[#allocation6 + $0x40] sm:$0xff]
        %v1476 = vld [vmem:[#allocation6 + $0x48] sm:$0xff]
        %v1477 = vld [vmem:[#allocation6 + $0x50] sm:$0xff]
        %v1478 = vld [vmem:[#allocation6 + $0x58] sm:$0xff]
        %v1479 = vld [vmem:[#allocation6 + $0x60] sm:$0xff]
        %v1480 = vld [vmem:[#allocation6 + $0x68] sm:$0xff]
        %v1481 = vld [vmem:[#allocation6 + $0x70] sm:$0xff]
        %v1482 = vld [vmem:[#allocation6 + $0x78] sm:$0xff]
        %v1483 = vld [vmem:[#allocation8] sm:$0xff]
        %v1484 = vld [vmem:[#allocation8 + $0x8] sm:$0xff]
        %v1485 = vld [vmem:[#allocation8 + $0x10] sm:$0xff]
        %v1486 = vld [vmem:[#allocation8 + $0x18] sm:$0xff]
        %v1487 = vld [vmem:[#allocation8 + $0x20] sm:$0xff]
        %v1488 = vld [vmem:[#allocation8 + $0x28] sm:$0xff]
        %v1489 = vld [vmem:[#allocation8 + $0x30] sm:$0xff]
        %v1490 = vld [vmem:[#allocation8 + $0x38] sm:$0xff]
        %v1491 = vld [vmem:[#allocation8 + $0x40] sm:$0xff]
        %v1492 = vld [vmem:[#allocation8 + $0x48] sm:$0xff]
        %v1493 = vld [vmem:[#allocation8 + $0x50] sm:$0xff]
        %v1494 = vld [vmem:[#allocation8 + $0x58] sm:$0xff]
        %v1495 = vld [vmem:[#allocation8 + $0x60] sm:$0xff]
        %v1496 = vld [vmem:[#allocation8 + $0x68] sm:$0xff]
        %v1497 = vld [vmem:[#allocation8 + $0x70] sm:$0xff]
        %v1498 = vld [vmem:[#allocation8 + $0x78] sm:$0xff]
        %v1515 = vunpack.c.l.b16 %v1483
        %v1516 = vunpack.c.h.b16 %v1483
        %v1517 = vunpack.c.l.b16 %v1484
        %v1518 = vunpack.c.h.b16 %v1484
        %v1519 = vunpack.c.l.b16 %v1485
        %v1520 = vunpack.c.h.b16 %v1485
        %v1521 = vunpack.c.l.b16 %v1486
        %v1522 = vunpack.c.h.b16 %v1486
        %v1523 = vunpack.c.l.b16 %v1487
        %v1524 = vunpack.c.h.b16 %v1487
        %v1525 = vunpack.c.l.b16 %v1488
        %v1526 = vunpack.c.h.b16 %v1488
        %v1527 = vunpack.c.l.b16 %v1489
        %v1528 = vunpack.c.h.b16 %v1489
        %v1529 = vunpack.c.l.b16 %v1490
        %v1530 = vunpack.c.h.b16 %v1490
        %v1531 = vunpack.c.l.b16 %v1491
        %v1532 = vunpack.c.h.b16 %v1491
        %v1533 = vunpack.c.l.b16 %v1492
        %v1534 = vunpack.c.h.b16 %v1492
        %v1535 = vunpack.c.l.b16 %v1493
        %v1536 = vunpack.c.h.b16 %v1493
        %v1537 = vunpack.c.l.b16 %v1494
        %v1538 = vunpack.c.h.b16 %v1494
        %v1539 = vunpack.c.l.b16 %v1495
        %v1540 = vunpack.c.h.b16 %v1495
        %v1541 = vunpack.c.l.b16 %v1496
        %v1542 = vunpack.c.h.b16 %v1496
        %v1543 = vunpack.c.l.b16 %v1497
        %v1544 = vunpack.c.h.b16 %v1497
        %v1545 = vunpack.c.l.b16 %v1498
        %v1546 = vunpack.c.h.b16 %v1498
        %v1547 = vpack.c.b16 %v1517, %v1515
        %v1548 = vpack.c.b16 %v1518, %v1516
        %v1549 = vpack.c.b16 %v1521, %v1519
        %v1550 = vpack.c.b16 %v1522, %v1520
        %v1551 = vpack.c.b16 %v1525, %v1523
        %v1552 = vpack.c.b16 %v1526, %v1524
        %v1553 = vpack.c.b16 %v1529, %v1527
        %v1554 = vpack.c.b16 %v1530, %v1528
        %v1555 = vpack.c.b16 %v1533, %v1531
        %v1556 = vpack.c.b16 %v1534, %v1532
        %v1557 = vpack.c.b16 %v1537, %v1535
        %v1558 = vpack.c.b16 %v1538, %v1536
        %v1559 = vpack.c.b16 %v1541, %v1539
        %v1560 = vpack.c.b16 %v1542, %v1540
        %v1561 = vpack.c.b16 %v1545, %v1543
        %v1562 = vpack.c.b16 %v1546, %v1544
        %1579 = vmatpush.bf16.msra.mxu0 %v1561
        %1580 = vmatpush.bf16.msra.mxu0 %v1559
        %1581 = vmatpush.bf16.msra.mxu0 %v1557
        %1582 = vmatpush.bf16.msra.mxu0 %v1555
        %1583 = vmatpush.bf16.msra.mxu0 %v1553
        %1584 = vmatpush.bf16.msra.mxu0 %v1551
        %1585 = vmatpush.bf16.msra.mxu0 %v1549
        %1586 = vmatpush.bf16.msra.mxu0 %v1547
        %1587 = vmatmul.bf16.gmra.mxu0 %v1466
        %v1588 = vpop.f32.mrf.mxu0
        %v1589 = vadd.f32 0.0, %v1588
        %v1590 = vpop.f32.mrf.mxu0
        %1591 = vdwg.mxu0
        %1592 = vmatpush.bf16.msra.mxu0 %v1562
        %1593 = vmatpush.bf16.msra.mxu0 %v1560
        %1594 = vmatpush.bf16.msra.mxu0 %v1558
        %1595 = vmatpush.bf16.msra.mxu0 %v1556
        %1596 = vmatpush.bf16.msra.mxu0 %v1554
        %1597 = vmatpush.bf16.msra.mxu0 %v1552
        %1598 = vmatpush.bf16.msra.mxu0 %v1550
        %1599 = vmatpush.bf16.msra.mxu0 %v1548
        %1600 = vmatmul.bf16.gmra.mxu0 %v1466
        %v1601 = vpop.f32.mrf.mxu0
        %v1602 = vadd.f32 0.0, %v1601
        %v1603 = vpop.f32.mrf.mxu0
        %1604 = vdwg.mxu0
        %v1621 = vunpack.c.l.b16 %v1467
        %v1622 = vunpack.c.h.b16 %v1467
        %v1623 = vunpack.c.l.b16 %v1468
        %v1624 = vunpack.c.h.b16 %v1468
        %v1625 = vunpack.c.l.b16 %v1469
        %v1626 = vunpack.c.h.b16 %v1469
        %v1627 = vunpack.c.l.b16 %v1470
        %v1628 = vunpack.c.h.b16 %v1470
        %v1629 = vunpack.c.l.b16 %v1471
        %v1630 = vunpack.c.h.b16 %v1471
        %v1631 = vunpack.c.l.b16 %v1472
        %v1632 = vunpack.c.h.b16 %v1472
        %v1633 = vunpack.c.l.b16 %v1473
        %v1634 = vunpack.c.h.b16 %v1473
        %v1635 = vunpack.c.l.b16 %v1474
        %v1636 = vunpack.c.h.b16 %v1474
        %v1637 = vunpack.c.l.b16 %v1475
        %v1638 = vunpack.c.h.b16 %v1475
        %v1639 = vunpack.c.l.b16 %v1476
        %v1640 = vunpack.c.h.b16 %v1476
        %v1641 = vunpack.c.l.b16 %v1477
        %v1642 = vunpack.c.h.b16 %v1477
        %v1643 = vunpack.c.l.b16 %v1478
        %v1644 = vunpack.c.h.b16 %v1478
        %v1645 = vunpack.c.l.b16 %v1479
        %v1646 = vunpack.c.h.b16 %v1479
        %v1647 = vunpack.c.l.b16 %v1480
        %v1648 = vunpack.c.h.b16 %v1480
        %v1649 = vunpack.c.l.b16 %v1481
        %v1650 = vunpack.c.h.b16 %v1481
        %v1651 = vunpack.c.l.b16 %v1482
        %v1652 = vunpack.c.h.b16 %v1482
        %v1653 = vpack.c.b16 %v1623, %v1621
        %v1654 = vpack.c.b16 %v1624, %v1622
        %v1655 = vpack.c.b16 %v1627, %v1625
        %v1656 = vpack.c.b16 %v1628, %v1626
        %v1657 = vpack.c.b16 %v1631, %v1629
        %v1658 = vpack.c.b16 %v1632, %v1630
        %v1659 = vpack.c.b16 %v1635, %v1633
        %v1660 = vpack.c.b16 %v1636, %v1634
        %v1661 = vpack.c.b16 %v1639, %v1637
        %v1662 = vpack.c.b16 %v1640, %v1638
        %v1663 = vpack.c.b16 %v1643, %v1641
        %v1664 = vpack.c.b16 %v1644, %v1642
        %v1665 = vpack.c.b16 %v1647, %v1645
        %v1666 = vpack.c.b16 %v1648, %v1646
        %v1667 = vpack.c.b16 %v1651, %v1649
        %v1668 = vpack.c.b16 %v1652, %v1650
        %1685 = vmatpush.bf16.msra.mxu0 %v1667
        %1686 = vmatpush.bf16.msra.mxu0 %v1665
        %1687 = vmatpush.bf16.msra.mxu0 %v1663
        %1688 = vmatpush.bf16.msra.mxu0 %v1661
        %1689 = vmatpush.bf16.msra.mxu0 %v1659
        %1690 = vmatpush.bf16.msra.mxu0 %v1657
        %1691 = vmatpush.bf16.msra.mxu0 %v1655
        %1692 = vmatpush.bf16.msra.mxu0 %v1653
        %1693 = vmatmul.bf16.gmra.mxu0 %v1464
        %v1694 = vpop.f32.mrf.mxu0
        %v1695 = vadd.f32 %v1589, %v1694
        %v1696 = vpop.f32.mrf.mxu0
        %1697 = vdwg.mxu0
        %1698 = vmatpush.bf16.msra.mxu0 %v1668
        %1699 = vmatpush.bf16.msra.mxu0 %v1666
        %1700 = vmatpush.bf16.msra.mxu0 %v1664
        %1701 = vmatpush.bf16.msra.mxu0 %v1662
        %1702 = vmatpush.bf16.msra.mxu0 %v1660
        %1703 = vmatpush.bf16.msra.mxu0 %v1658
        %1704 = vmatpush.bf16.msra.mxu0 %v1656
        %1705 = vmatpush.bf16.msra.mxu0 %v1654
        %1706 = vmatmul.bf16.gmra.mxu0 %v1464
        %v1707 = vpop.f32.mrf.mxu0
        %v1708 = vadd.f32 %v1602, %v1707
        %v1709 = vpop.f32.mrf.mxu0
        %1710 = vdwg.mxu0
        %v1713 = vrot.slane %v1708, 7
        %v1714 = vsel %vm693, %v1695, %v1713
        %v1716 = vlaneseq
        %vm1717 = vcmp.ge.s32.totalorder %v1716, 0
        %vm1718 = vcmp.lt.s32.totalorder %v1716, 256
        %vm1719 = vmand %vm1717, %vm1718
        %1720 = vst.msk [vmem:[%s646] sm:$0x3] %vm1719, %v1714
        %s1721 = sand.u32 %s449, 1
        %s1722 = scalar_lea.sflag [#allocation5], %s1721
        %s1723 = sand.u32 %s449, 1
        %s1724 = smul.addr %s1723, 2
        %s1725 = scalar_lea.vmem [#allocation9], %s1724
        // Predicated region
        $region109: #{tpu_custom_call.1} parent=95 // pred_check
          %p1726 = pneg %p459
        $region110: #{tpu_custom_call.1} parent=95 // pred_check_branch
          %1728 = sbr.rel (%p1726) target = $region112
        $region111: #{tpu_custom_call.1} parent=95 // pred_region
          %s1729 = smul.u32 2, %s37
          %1731 = vsyncadd %s1722, 0
          %s1732 = scalar_lea.hbm %s19, %s1729
          %s1734 = sshll.u32 %s1725, 4
          %s1735 = int_to_ptr.vmem [resolvable:$true] %s1734
          %s1736 = sshll.u32 %s1732, 4
          %s1737 = int_to_ptr.hbm [resolvable:$true] %s1736
          %1739 = dma.vmem_to_hbm [thread:$0]  %s1735, 32, %s1737, %s1722
        $region112: #{tpu_custom_call.1} parent=95 // pred_fallthru
          _
      $region96: #{tpu_custom_call.1} parent=5 // pred_fallthru
        _
      %p1740 = scmp.le.s32.totalorder 2, %s32
      // Predicated region
      $region113: #{tpu_custom_call.1} parent=5 // pred_check
        %p1741 = pneg %p1740
      $region114: #{tpu_custom_call.1} parent=5 // pred_check_branch
        %1743 = sbr.rel (%p1741) target = $region116
      $region115: #{tpu_custom_call.1} parent=5 // pred_region
        %s1744 = ssub.s32 %s32, 2
        // Predicated region
        $region117: #{tpu_custom_call.1} parent=115 // pred_check
          %p1745 = pneg %p465
        $region118: #{tpu_custom_call.1} parent=115 // pred_check_branch
          %1747 = sbr.rel (%p1745) target = $region120
        $region119: #{tpu_custom_call.1} parent=115 // pred_region
          %s1748 = sand.u32 %s450, 1
          %s1749 = scalar_lea.sflag [#allocation5], %s1748
          %s1750 = sand.u32 %s450, 1
          %s1751 = smul.addr %s1750, 2
          %s1752 = scalar_lea.vmem [#allocation9], %s1751
          %1754 = dma.done %s1749, 32
        $region120: #{tpu_custom_call.1} parent=115 // pred_fallthru
          _
      $region116: #{tpu_custom_call.1} parent=5 // pred_fallthru
        _
    $region6: #{tpu_custom_call.1} parent=1 // loop_footer
      %s36 = sadd.s32 1, %s32
    $region7: #{tpu_custom_call.1} parent=1 // loop_footer_branch
      %31 = sbr.rel target = $region3
    $region8: #{tpu_custom_call.1} parent=1 // loop_exit
      _
    %1755 = vsyncpa [#allocation4], 1
    %s1756 = scalar_lea.sflag [#allocation4], 1
    %1757 = vsyncpa %s1756, 1
    %1758 = vsyncpa [#allocation7], 1
    %1759 = vsyncpa [#allocation5], 1
    %s1760 = scalar_lea.sflag [#allocation5], 1
    %1761 = vsyncpa %s1760, 1

</llo_original>
